<compile_context>
chip_gen: v6e
topology: v6e:2x2x1
jax: 0.10.0
libtpu: 0.0.40
codegen_flags: <defaults>
</compile_context>

<pallas_src>
import jax
import jax.numpy as jnp
from jax.experimental import pallas as pl
from jax.experimental.pallas import tpu as pltpu

FEAT_DIM = 2048   # ResNet-50 layer4 output channels
PARTS = 6         # PCB_test self.part


def _build_pool_matrix_t(H, W, parts, dtype=jnp.float32):
    """(parts, H*W) matrix P_T s.t. P_T @ X(HW, C) == AdaptiveAvgPool2d((parts,1)) of X(H,W,C).

    Exact adaptive-bin semantics: bin p covers rows [floor(p*H/parts), ceil((p+1)*H/parts)),
    with the 1/(rows_in_bin * W) average folded into the matrix.
    """
    h_idx = jnp.arange(H)
    p_idx = jnp.arange(parts)
    start = (p_idx * H) // parts                       # floor(p*H/parts)
    end = -((-(p_idx + 1) * H) // parts)               # ceil((p+1)*H/parts)
    in_bin = (h_idx[None, :] >= start[:, None]) & (h_idx[None, :] < end[:, None])  # (parts, H)
    counts = (end - start).astype(dtype)               # rows per part
    per_row = in_bin.astype(dtype) / (counts[:, None] * float(W))                  # (parts, H)
    # Flattened spatial index is h*W + w: each column of `per_row` repeats W times.
    return jnp.repeat(per_row, W, axis=1)              # (parts, H*W)


def _pcb_pool_kernel(x_ref, pt_ref, o_ref):
    # x_ref:  (IMG_BLK, HW, C)  NHWC features of IMG_BLK images, spatially flattened
    # pt_ref: (parts, HW)       transposed pooling matrix, VMEM-resident
    # o_ref:  (IMG_BLK, parts, C)  lane-dense (C = multiple of 128) output tile
    pt = pt_ref[...]
    for i in range(x_ref.shape[0]):     # static, unrolls (IMG_BLK is 1..4)
        pooled = jnp.dot(pt, x_ref[i], preferred_element_type=jnp.float32)
        o_ref[i] = pooled.astype(o_ref.dtype)


def _pick_img_blk(B, max_blk=4):
    """Images per grid step: amortize per-step overhead, keep grid >= 2 when possible."""
    blk = max(1, min(max_blk, B // 2))
    while B % blk:
        blk -= 1
    return blk


def pcb_test_head(feats_nhwc, parts=PARTS):
    """PCB_test head on backbone features.

    feats_nhwc: (B, H, W, C) float32 ResNet-50 layer4 feature maps (stride-1 layer4),
                in the TPU-native NHWC layout.
    Returns (B, C, parts) float32 — identical to PCB_test.forward's `y`.
    """
    B, H, W, C = feats_nhwc.shape
    HW = H * W
    x = feats_nhwc.reshape(B, HW, C)            # contiguous reshape, no data movement
    Pt = _build_pool_matrix_t(H, W, parts)      # (parts, HW) fp32, ~parts*HW*4 bytes

    img_blk = _pick_img_blk(B)
    grid_len = B // img_blk

    cost = pl.CostEstimate(
        flops=2 * B * parts * HW * C,
        transcendentals=0,
        bytes_accessed=(B * HW * C + B * parts * C + parts * HW) * 4,
    )

    pooled = pl.pallas_call(
        _pcb_pool_kernel,
        grid=(grid_len,),
        in_specs=[
            pl.BlockSpec((img_blk, HW, C), lambda b: (b, 0, 0)),   # streamed, double-buffered
            pl.BlockSpec((parts, HW), lambda b: (0, 0)),           # constant -> loaded once
        ],
        out_specs=pl.BlockSpec((img_blk, parts, C), lambda b: (b, 0, 0)),
        out_shape=jax.ShapeDtypeStruct((B, parts, C), jnp.float32),
        compiler_params=pltpu.CompilerParams(
            dimension_semantics=("parallel",),
        ),
        cost_estimate=cost,
    )(x, Pt)

    # Tiny layout fixup to the module's (B, C, parts) output — ~B*48 KB, negligible.
    return jnp.transpose(pooled, (0, 2, 1))


def pcb_test_head_from_nchw(feats_nchw, parts=PARTS):
    """Convenience entry for NCHW (PyTorch-layout) features.

    Prefer running the backbone in NHWC so this full-activation transpose disappears;
    here it is a single XLA op over the feature maps.
    """
    return pcb_test_head(jnp.transpose(feats_nchw, (0, 2, 3, 1)), parts=parts)


if __name__ == "__main__":
    # Standard PCB setup: 384x192 input -> ResNet-50 with stride-1 layer4 -> (B, 2048, 24, 8).
    B, C, H, W = 4, FEAT_DIM, 24, 8

    key = jax.random.PRNGKey(0)
    feats_nchw = jax.random.normal(key, (B, C, H, W), dtype=jnp.float32)
    feats_nhwc = jnp.transpose(feats_nchw, (0, 2, 3, 1))

    y = pcb_test_head(feats_nhwc)
    jax.block_until_ready(y)
    assert y.shape == (B, C, PARTS) and y.dtype == jnp.float32

    # Independent reference: uniform bins since H % PARTS == 0 here.
    ref = feats_nchw.reshape(B, C, PARTS, H // PARTS, W).mean(axis=(3, 4))
    assert jnp.allclose(y, ref, rtol=1e-4, atol=1e-4)

    # NCHW convenience path must match as well.
    y2 = pcb_test_head_from_nchw(feats_nchw)
    jax.block_until_ready(y2)
    assert jnp.allclose(y2, ref, rtol=1e-4, atol=1e-4)

    print("KERNEL_OK")
</pallas_src>

<mosaic_0001>
module attributes {stable_mosaic.version = 11 : i64} {
  func.func @_pcb_pool_kernel(%arg0: i32, %arg1: memref<2x192x2048xf32, #tpu.memory_space<vmem>>, %arg2: memref<6x192xf32, #tpu.memory_space<vmem>>, %arg3: memref<2x6x2048xf32, #tpu.memory_space<vmem>>) attributes {dimension_semantics = [#tpu.dimension_semantics<parallel>], iteration_bounds = array<i64: 2>, scalar_prefetch = 0 : i64, scratch_operands = 0 : i64, tpu.core_type = #tpu.core_type<tc>, window_params = [{transform_indices = @transform_0, window_bounds = array<i64: 2, 192, 2048>}, {pipeline_mode = #tpu.pipeline_mode<synchronous>, transform_indices = @transform_1, window_bounds = array<i64: 6, 192>}, {transform_indices = @transform_2, window_bounds = array<i64: 2, 6, 2048>}]} {
    %c0 = arith.constant 0 : index
    %c0_0 = arith.constant 0 : index
    %0 = vector.load %arg2[%c0, %c0_0] : memref<6x192xf32, #tpu.memory_space<vmem>>, vector<6x192xf32>
    %c0_1 = arith.constant 0 : index
    %c0_2 = arith.constant 0 : index
    %c0_3 = arith.constant 0 : index
    %1 = vector.load %arg1[%c0_1, %c0_2, %c0_3] : memref<2x192x2048xf32, #tpu.memory_space<vmem>>, vector<1x192x2048xf32>
    %2 = vector.shape_cast %1 : vector<1x192x2048xf32> to vector<192x2048xf32>
    %cst = arith.constant dense<0.000000e+00> : vector<6x2048xf32>
    %3 = tpu.matmul %0, %2, %cst {dimension_numbers = #tpu.dot_dimension_numbers<[1], [0], [0], [1], [0, 0, 1, 1], [], []>} : vector<6x192xf32>, vector<192x2048xf32>, vector<6x2048xf32> -> vector<6x2048xf32>
    %c0_4 = arith.constant 0 : index
    %c0_5 = arith.constant 0 : index
    %c0_6 = arith.constant 0 : index
    %4 = vector.load %arg3[%c0_4, %c0_5, %c0_6] : memref<2x6x2048xf32, #tpu.memory_space<vmem>>, vector<1x6x2048xf32>
    %5 = vector.shape_cast %4 : vector<1x6x2048xf32> to vector<6x2048xf32>
    %6 = vector.shape_cast %3 : vector<6x2048xf32> to vector<1x6x2048xf32>
    tpu.vector_store %arg3[%c0_4, %c0_5, %c0_6], %6 {strides = array<i32>} : memref<2x6x2048xf32, #tpu.memory_space<vmem>>, vector<1x6x2048xf32>,
    %c1 = arith.constant 1 : index
    %c0_7 = arith.constant 0 : index
    %c0_8 = arith.constant 0 : index
    %7 = vector.load %arg1[%c1, %c0_7, %c0_8] : memref<2x192x2048xf32, #tpu.memory_space<vmem>>, vector<1x192x2048xf32>
    %8 = vector.shape_cast %7 : vector<1x192x2048xf32> to vector<192x2048xf32>
    %cst_9 = arith.constant dense<0.000000e+00> : vector<6x2048xf32>
    %9 = tpu.matmul %0, %8, %cst_9 {dimension_numbers = #tpu.dot_dimension_numbers<[1], [0], [0], [1], [0, 0, 1, 1], [], []>} : vector<6x192xf32>, vector<192x2048xf32>, vector<6x2048xf32> -> vector<6x2048xf32>
    %c1_10 = arith.constant 1 : index
    %c0_11 = arith.constant 0 : index
    %c0_12 = arith.constant 0 : index
    %10 = vector.load %arg3[%c1_10, %c0_11, %c0_12] : memref<2x6x2048xf32, #tpu.memory_space<vmem>>, vector<1x6x2048xf32>
    %11 = vector.shape_cast %10 : vector<1x6x2048xf32> to vector<6x2048xf32>
    %12 = vector.shape_cast %9 : vector<6x2048xf32> to vector<1x6x2048xf32>
    tpu.vector_store %arg3[%c1_10, %c0_11, %c0_12], %12 {strides = array<i32>} : memref<2x6x2048xf32, #tpu.memory_space<vmem>>, vector<1x6x2048xf32>,
    return
  }
  func.func @transform_0(%arg0: i32) -> (i32, i32, i32) {
    %c0_i32 = arith.constant 0 : i32
    %c0_i32_0 = arith.constant 0 : i32
    %c0_i32_1 = arith.constant 0 : i32
    return %arg0, %c0_i32, %c0_i32_0 : i32, i32, i32
  }
  func.func @transform_1(%arg0: i32) -> (i32, i32) {
    %c0_i32 = arith.constant 0 : i32
    %c0_i32_0 = arith.constant 0 : i32
    %c0_i32_1 = arith.constant 0 : i32
    return %c0_i32, %c0_i32_0 : i32, i32
  }
  func.func @transform_2(%arg0: i32) -> (i32, i32, i32) {
    %c0_i32 = arith.constant 0 : i32
    %c0_i32_0 = arith.constant 0 : i32
    %c0_i32_1 = arith.constant 0 : i32
    return %arg0, %c0_i32, %c0_i32_0 : i32, i32, i32
  }
}

</mosaic_0001>

<llo_original>
// kernel: tpu_custom_call.1
$region0: #{tpu_custom_call.1}
  #allocation0 [shape = 'u32[]', space=smem, size = 0x4, offset = 0x4, fixed_abs, tag = 'smem constant byte address 0x4 - core index']
  #allocation1 [shape = 'u32[144,128]{1,0:T(1,128)}', space=vmem, size = 0x12000, scoped, tag = 'internal scratch']
  %s0 = inlined_call_operand.hbm [shape: f32[4,192,2048], index: 0, kind: input, shape index: {}]
  %s1 = inlined_call_operand.hbm [shape: f32[6,192], index: 1, kind: input, shape index: {}]
  %s2 = inlined_call_operand.vmem [shape: f32[4,6,2048], index: 2, kind: output, shape index: {}]
  %s3 = sld [smem:[#allocation0]]
  $region49: #{tpu_custom_call.1} parent=0
    _
  %s5 = ssub.s32 1, %s3
  %s6 = scalar_select 0, %s5, %s3
  $region1: #{tpu_custom_call.1} parent=0
    #allocation2 [shape = 'u8[6291456]{0}', space=vmem, size = 0x600000, scoped, tag = 'input window, operand 0']
    #allocation3 [shape = 's32[2]{0}', space=sflag, size = 0x8, scoped, tag = 'scoped memory for tpu_custom_call.1']
    #allocation4 [shape = 'u8[8192]{0}', space=vmem, size = 0x2000, scoped, tag = 'input window, operand 1, single buffered']
    #allocation5 [shape = 's32[1]{0}', space=sflag, size = 0x4, scoped, tag = 'scoped memory for tpu_custom_call.1']
    %7 = vsyncpa [#allocation3], 0
    %s8 = scalar_lea.sflag [#allocation3], 1
    %9 = vsyncpa %s8, 0
    %10 = vsyncpa [#allocation5], 0
    loop: start=0, step=1, limit=4
    $region2: #{tpu_custom_call.1} parent=1 // loop_pre_header
      _
    $region3: #{tpu_custom_call.1} parent=1 // loop_header
      %s12 = sphi 0, %s16
      %p13 = scmp.ge.s32.totalorder %s12, 4
      %s22 = sphi 0, %s24
      %s25 = sphi 0, %s22
      %s26 = sphi 0, %s25
      %s42 = sphi 0, %s26
      %s46 = sphi 0, %s46
      %s48 = sphi 0, %s46
      %s49 = sphi 0, %s48
      %s63 = sphi 0, %s49
      %s69 = sphi 0, %s71
      %s72 = sphi 0, %s69
      %s73 = sphi 0, %s72
      %s89 = sphi 0, %s73
    $region4: #{tpu_custom_call.1} parent=1 // loop_header_branch
      %15 = sbr.rel (%p13) target = $region8
    $region5: #{tpu_custom_call.1} parent=1 // loop_body
      %s17 = ssub.s32 %s12, 1
      %s18 = ssub.s32 %s12, 2
      %s19 = sadd.s32 %s12, 1
      %s20 = ssub.s32 %s12, %s19
      %p21 = scmp.eq.s32.totalorder %s20, 0
      %s23 = sadd.s32 %s22, 1
      %s24 = scalar_select %p21, %s22, %s23
      %p27 = pneg %p21
      %p28 = scmp.eq.s32.totalorder %s12, 1
      %p29 = por %p27, %p28
      %p30 = scmp.ne.s32.totalorder %s22, %s25
      %p31 = scmp.eq.s32.totalorder %s12, 0
      %p32 = por %p30, %p31
      %p33 = scmp.ne.s32.totalorder %s22, %s25
      %p34 = scmp.eq.s32.totalorder %s17, 1
      %p35 = por %p33, %p34
      %p36 = scmp.ne.s32.totalorder %s25, %s26
      %p37 = scmp.eq.s32.totalorder %s17, 0
      %p38 = por %p36, %p37
      %p39 = scmp.ne.s32.totalorder %s25, %s26
      %p40 = scmp.eq.s32.totalorder %s18, 1
      %p41 = por %p39, %p40
      %p43 = scmp.ne.s32.totalorder %s26, %s42
      %p44 = scmp.eq.s32.totalorder %s18, 0
      %p45 = por %p43, %p44
      %s47 = sadd.s32 %s46, 1
      %p50 = scmp.eq.s32.totalorder %s12, 1
      %p51 = scmp.ne.s32.totalorder %s46, %s48
      %p52 = scmp.eq.s32.totalorder %s12, 0
      %p53 = por %p51, %p52
      %p54 = scmp.ne.s32.totalorder %s46, %s48
      %p55 = scmp.eq.s32.totalorder %s17, 1
      %p56 = por %p54, %p55
      %p57 = scmp.ne.s32.totalorder %s48, %s49
      %p58 = scmp.eq.s32.totalorder %s17, 0
      %p59 = por %p57, %p58
      %p60 = scmp.ne.s32.totalorder %s48, %s49
      %p61 = scmp.eq.s32.totalorder %s18, 1
      %p62 = por %p60, %p61
      %p64 = scmp.ne.s32.totalorder %s49, %s63
      %p65 = scmp.eq.s32.totalorder %s18, 0
      %p66 = por %p64, %p65
      %s67 = ssub.s32 %s12, %s19
      %p68 = scmp.eq.s32.totalorder %s67, 0
      %s70 = sadd.s32 %s69, 1
      %s71 = scalar_select %p68, %s69, %s70
      %p74 = pneg %p68
      %p75 = scmp.eq.s32.totalorder %s12, 1
      %p76 = por %p74, %p75
      %p77 = scmp.ne.s32.totalorder %s69, %s72
      %p78 = scmp.eq.s32.totalorder %s12, 0
      %p79 = por %p77, %p78
      %p80 = scmp.ne.s32.totalorder %s69, %s72
      %p81 = scmp.eq.s32.totalorder %s17, 1
      %p82 = por %p80, %p81
      %p83 = scmp.ne.s32.totalorder %s72, %s73
      %p84 = scmp.eq.s32.totalorder %s17, 0
      %p85 = por %p83, %p84
      %p86 = scmp.ne.s32.totalorder %s72, %s73
      %p87 = scmp.eq.s32.totalorder %s18, 1
      %p88 = por %p86, %p87
      %p90 = scmp.ne.s32.totalorder %s73, %s89
      %p91 = scmp.eq.s32.totalorder %s18, 0
      %p92 = por %p90, %p91
      %p93 = scmp.le.s32.totalorder 1, %s12
      %p94 = scmp.lt.s32.totalorder %s12, 3
      %p95 = pnand %p93, %p94
      %p96 = pneg %p95
      // Predicated region
      $region9: #{tpu_custom_call.1} parent=5 // pred_check
        _
      $region10: #{tpu_custom_call.1} parent=5 // pred_check_branch
        %98 = sbr.rel (%p95) target = $region12
      $region11: #{tpu_custom_call.1} parent=5 // pred_region
        %s99 = ssub.s32 %s12, 1
        // Predicated region
        $region13: #{tpu_custom_call.1} parent=11 // pred_check
          %p100 = pneg %p59
        $region14: #{tpu_custom_call.1} parent=11 // pred_check_branch
          %102 = sbr.rel (%p100) target = $region16
        $region15: #{tpu_custom_call.1} parent=11 // pred_region
          %s104 = ssub.s32 256, 256
          %105 = vsyncadd [#allocation5], %s104
          %s107 = sshll.u32 [#allocation4], 4
          %s108 = int_to_ptr.vmem [resolvable:$true] %s107
          %110 = dma.hbm_to_vmem [thread:$0]  %s1, 256, %s108, [#allocation5]
        $region16: #{tpu_custom_call.1} parent=11 // pred_fallthru
          _
      $region12: #{tpu_custom_call.1} parent=5 // pred_fallthru
        _
      %p111 = scmp.lt.s32.totalorder %s12, 2
      // Predicated region
      $region17: #{tpu_custom_call.1} parent=5 // pred_check
        %p112 = pneg %p111
      $region18: #{tpu_custom_call.1} parent=5 // pred_check_branch
        %114 = sbr.rel (%p112) target = $region20
      $region19: #{tpu_custom_call.1} parent=5 // pred_region
        // Predicated region
        $region21: #{tpu_custom_call.1} parent=19 // pred_check
          %p115 = pneg %p32
        $region22: #{tpu_custom_call.1} parent=19 // pred_check_branch
          %117 = sbr.rel (%p115) target = $region24
        $region23: #{tpu_custom_call.1} parent=19 // pred_region
          %s118 = sand.u32 %s22, 1
          %s119 = scalar_lea.sflag [#allocation3], %s118
          %s120 = sand.u32 %s22, 1
          %s121 = smul.addr %s120, 6144
          %s122 = scalar_lea.vmem [#allocation2], %s121
          %s123 = smul.u32 2, %s12
          %s125 = ssub.s32 98304, 98304
          %126 = vsyncadd %s119, %s125
          %s127 = smul.addr %s123, 384
          %s128 = smul.addr %s127, 128
          %s129 = scalar_lea.hbm %s0, %s128
          %s130 = sshll.u32 %s122, 4
          %s131 = int_to_ptr.vmem [resolvable:$true] %s130
          %136 = dma.hbm_to_vmem [thread:$0]  %s129, 98304, %s131, %s119, 2048, 2048, 128
        $region24: #{tpu_custom_call.1} parent=19 // pred_fallthru
          _
      $region20: #{tpu_custom_call.1} parent=5 // pred_fallthru
        _
      %p137 = scmp.le.s32.totalorder 1, %s12
      %p138 = scmp.lt.s32.totalorder %s12, 3
      %p139 = pnand %p137, %p138
      %p140 = pneg %p139
      // Predicated region
      $region25: #{tpu_custom_call.1} parent=5 // pred_check
        _
      $region26: #{tpu_custom_call.1} parent=5 // pred_check_branch
        %142 = sbr.rel (%p139) target = $region28
      $region27: #{tpu_custom_call.1} parent=5 // pred_region
        %s143 = ssub.s32 %s12, 1
        %s144 = sand.u32 %s25, 1
        %s145 = scalar_lea.sflag [#allocation3], %s144
        %s146 = sand.u32 %s25, 1
        %s147 = smul.addr %s146, 6144
        %s148 = scalar_lea.vmem [#allocation2], %s147
        // Predicated region
        $region29: #{tpu_custom_call.1} parent=27 // pred_check
          %p149 = pneg %p38
        $region30: #{tpu_custom_call.1} parent=27 // pred_check_branch
          %151 = sbr.rel (%p149) target = $region32
        $region31: #{tpu_custom_call.1} parent=27 // pred_region
          %152 = dma.done %s145, 98304
        $region32: #{tpu_custom_call.1} parent=27 // pred_fallthru
          _
        // Predicated region
        $region33: #{tpu_custom_call.1} parent=27 // pred_check
          %p153 = pneg %p59
        $region34: #{tpu_custom_call.1} parent=27 // pred_check_branch
          %155 = sbr.rel (%p153) target = $region36
        $region35: #{tpu_custom_call.1} parent=27 // pred_region
          %156 = dma.done [#allocation5], 256
        $region36: #{tpu_custom_call.1} parent=27 // pred_fallthru
          _
        %s157 = sand.u32 %s25, 1
        %s158 = scalar_lea.sflag [#allocation3], %s157
        %s159 = sand.u32 %s25, 1
        %s160 = smul.addr %s159, 6144
        %s161 = scalar_lea.vmem [#allocation2], %s160
        %p162 = pneg %p38
        %p163 = pneg %p35
        %p164 = pneg %p59
        %p165 = pneg %p56
        %p166 = pneg %p85
        %p167 = pneg %p82
        %s168 = smul.u32 2, %s17
        %p169 = scmp.lt.s32.totalorder %s168, 3
        %s170 = scalar_select %p169, %s168, 3
        %s171 = smul.addr %s170, 16
        %s172 = smul.addr %s171, 8
        %s173 = scalar_lea.vmem %s2, %s172
        %s174 = smul.u32 2, %s17
        %s175 = smul.u32 2, %s17
        %p176 = scmp.lt.s32.totalorder %s175, 3
        %s177 = scalar_select %p176, %s175, 3
        %s178 = smul.addr %s177, 16
        %s179 = smul.addr %s178, 8
        %s180 = scalar_lea.vmem %s2, %s179
        %s181 = smul.u32 2, %s17
        %v182 = vld [vmem:[#allocation4] sm:$0x3f]
        %v183 = vld [vmem:[#allocation4 + $0x8] sm:$0x3f]
        %v184 = vld [vmem:[%s148] sm:$0xff]
        %v185 = vld [vmem:[%s148 + $0x8] sm:$0xff]
        %v186 = vld [vmem:[%s148 + $0x10] sm:$0xff]
        %v187 = vld [vmem:[%s148 + $0x18] sm:$0xff]
        %v188 = vld [vmem:[%s148 + $0x20] sm:$0xff]
        %v189 = vld [vmem:[%s148 + $0x28] sm:$0xff]
        %v190 = vld [vmem:[%s148 + $0x30] sm:$0xff]
        %v191 = vld [vmem:[%s148 + $0x38] sm:$0xff]
        %v192 = vld [vmem:[%s148 + $0x40] sm:$0xff]
        %v193 = vld [vmem:[%s148 + $0x48] sm:$0xff]
        %v194 = vld [vmem:[%s148 + $0x50] sm:$0xff]
        %v195 = vld [vmem:[%s148 + $0x58] sm:$0xff]
        %v196 = vld [vmem:[%s148 + $0x60] sm:$0xff]
        %v197 = vld [vmem:[%s148 + $0x68] sm:$0xff]
        %v198 = vld [vmem:[%s148 + $0x70] sm:$0xff]
        %v199 = vld [vmem:[%s148 + $0x78] sm:$0xff]
        %v200 = vld [vmem:[%s148 + $0x80] sm:$0xff]
        %v201 = vld [vmem:[%s148 + $0x88] sm:$0xff]
        %v202 = vld [vmem:[%s148 + $0x90] sm:$0xff]
        %v203 = vld [vmem:[%s148 + $0x98] sm:$0xff]
        %v204 = vld [vmem:[%s148 + $0xa0] sm:$0xff]
        %v205 = vld [vmem:[%s148 + $0xa8] sm:$0xff]
        %v206 = vld [vmem:[%s148 + $0xb0] sm:$0xff]
        %v207 = vld [vmem:[%s148 + $0xb8] sm:$0xff]
        %v208 = vld [vmem:[%s148 + $0xc0] sm:$0xff]
        %v209 = vld [vmem:[%s148 + $0xc8] sm:$0xff]
        %v210 = vld [vmem:[%s148 + $0xd0] sm:$0xff]
        %v211 = vld [vmem:[%s148 + $0xd8] sm:$0xff]
        %v212 = vld [vmem:[%s148 + $0xe0] sm:$0xff]
        %v213 = vld [vmem:[%s148 + $0xe8] sm:$0xff]
        %v214 = vld [vmem:[%s148 + $0xf0] sm:$0xff]
        %v215 = vld [vmem:[%s148 + $0xf8] sm:$0xff]
        %v216 = vld [vmem:[%s148 + $0x100] sm:$0xff]
        %v217 = vld [vmem:[%s148 + $0x108] sm:$0xff]
        %v218 = vld [vmem:[%s148 + $0x110] sm:$0xff]
        %v219 = vld [vmem:[%s148 + $0x118] sm:$0xff]
        %v220 = vld [vmem:[%s148 + $0x120] sm:$0xff]
        %v221 = vld [vmem:[%s148 + $0x128] sm:$0xff]
        %v222 = vld [vmem:[%s148 + $0x130] sm:$0xff]
        %v223 = vld [vmem:[%s148 + $0x138] sm:$0xff]
        %v224 = vld [vmem:[%s148 + $0x140] sm:$0xff]
        %v225 = vld [vmem:[%s148 + $0x148] sm:$0xff]
        %v226 = vld [vmem:[%s148 + $0x150] sm:$0xff]
        %v227 = vld [vmem:[%s148 + $0x158] sm:$0xff]
        %v228 = vld [vmem:[%s148 + $0x160] sm:$0xff]
        %v229 = vld [vmem:[%s148 + $0x168] sm:$0xff]
        %v230 = vld [vmem:[%s148 + $0x170] sm:$0xff]
        %v231 = vld [vmem:[%s148 + $0x178] sm:$0xff]
        %v232 = vld [vmem:[%s148 + $0x180] sm:$0xff]
        %v233 = vld [vmem:[%s148 + $0x188] sm:$0xff]
        %v234 = vld [vmem:[%s148 + $0x190] sm:$0xff]
        %v235 = vld [vmem:[%s148 + $0x198] sm:$0xff]
        %v236 = vld [vmem:[%s148 + $0x1a0] sm:$0xff]
        %v237 = vld [vmem:[%s148 + $0x1a8] sm:$0xff]
        %v238 = vld [vmem:[%s148 + $0x1b0] sm:$0xff]
        %v239 = vld [vmem:[%s148 + $0x1b8] sm:$0xff]
        %v240 = vld [vmem:[%s148 + $0x1c0] sm:$0xff]
        %v241 = vld [vmem:[%s148 + $0x1c8] sm:$0xff]
        %v242 = vld [vmem:[%s148 + $0x1d0] sm:$0xff]
        %v243 = vld [vmem:[%s148 + $0x1d8] sm:$0xff]
        %v244 = vld [vmem:[%s148 + $0x1e0] sm:$0xff]
        %v245 = vld [vmem:[%s148 + $0x1e8] sm:$0xff]
        %v246 = vld [vmem:[%s148 + $0x1f0] sm:$0xff]
        %v247 = vld [vmem:[%s148 + $0x1f8] sm:$0xff]
        %v248 = vld [vmem:[%s148 + $0x200] sm:$0xff]
        %v249 = vld [vmem:[%s148 + $0x208] sm:$0xff]
        %v250 = vld [vmem:[%s148 + $0x210] sm:$0xff]
        %v251 = vld [vmem:[%s148 + $0x218] sm:$0xff]
        %v252 = vld [vmem:[%s148 + $0x220] sm:$0xff]
        %v253 = vld [vmem:[%s148 + $0x228] sm:$0xff]
        %v254 = vld [vmem:[%s148 + $0x230] sm:$0xff]
        %v255 = vld [vmem:[%s148 + $0x238] sm:$0xff]
        %v256 = vld [vmem:[%s148 + $0x240] sm:$0xff]
        %v257 = vld [vmem:[%s148 + $0x248] sm:$0xff]
        %v258 = vld [vmem:[%s148 + $0x250] sm:$0xff]
        %v259 = vld [vmem:[%s148 + $0x258] sm:$0xff]
        %v260 = vld [vmem:[%s148 + $0x260] sm:$0xff]
        %v261 = vld [vmem:[%s148 + $0x268] sm:$0xff]
        %v262 = vld [vmem:[%s148 + $0x270] sm:$0xff]
        %v263 = vld [vmem:[%s148 + $0x278] sm:$0xff]
        %v264 = vld [vmem:[%s148 + $0x280] sm:$0xff]
        %v265 = vld [vmem:[%s148 + $0x288] sm:$0xff]
        %v266 = vld [vmem:[%s148 + $0x290] sm:$0xff]
        %v267 = vld [vmem:[%s148 + $0x298] sm:$0xff]
        %v268 = vld [vmem:[%s148 + $0x2a0] sm:$0xff]
        %v269 = vld [vmem:[%s148 + $0x2a8] sm:$0xff]
        %v270 = vld [vmem:[%s148 + $0x2b0] sm:$0xff]
        %v271 = vld [vmem:[%s148 + $0x2b8] sm:$0xff]
        %v272 = vld [vmem:[%s148 + $0x2c0] sm:$0xff]
        %v273 = vld [vmem:[%s148 + $0x2c8] sm:$0xff]
        %v274 = vld [vmem:[%s148 + $0x2d0] sm:$0xff]
        %v275 = vld [vmem:[%s148 + $0x2d8] sm:$0xff]
        %v276 = vld [vmem:[%s148 + $0x2e0] sm:$0xff]
        %v277 = vld [vmem:[%s148 + $0x2e8] sm:$0xff]
        %v278 = vld [vmem:[%s148 + $0x2f0] sm:$0xff]
        %v279 = vld [vmem:[%s148 + $0x2f8] sm:$0xff]
        %v280 = vld [vmem:[%s148 + $0x300] sm:$0xff]
        %v281 = vld [vmem:[%s148 + $0x308] sm:$0xff]
        %v282 = vld [vmem:[%s148 + $0x310] sm:$0xff]
        %v283 = vld [vmem:[%s148 + $0x318] sm:$0xff]
        %v284 = vld [vmem:[%s148 + $0x320] sm:$0xff]
        %v285 = vld [vmem:[%s148 + $0x328] sm:$0xff]
        %v286 = vld [vmem:[%s148 + $0x330] sm:$0xff]
        %v287 = vld [vmem:[%s148 + $0x338] sm:$0xff]
        %v288 = vld [vmem:[%s148 + $0x340] sm:$0xff]
        %v289 = vld [vmem:[%s148 + $0x348] sm:$0xff]
        %v290 = vld [vmem:[%s148 + $0x350] sm:$0xff]
        %v291 = vld [vmem:[%s148 + $0x358] sm:$0xff]
        %v292 = vld [vmem:[%s148 + $0x360] sm:$0xff]
        %v293 = vld [vmem:[%s148 + $0x368] sm:$0xff]
        %v294 = vld [vmem:[%s148 + $0x370] sm:$0xff]
        %v295 = vld [vmem:[%s148 + $0x378] sm:$0xff]
        %v296 = vld [vmem:[%s148 + $0x380] sm:$0xff]
        %v297 = vld [vmem:[%s148 + $0x388] sm:$0xff]
        %v298 = vld [vmem:[%s148 + $0x390] sm:$0xff]
        %v299 = vld [vmem:[%s148 + $0x398] sm:$0xff]
        %v300 = vld [vmem:[%s148 + $0x3a0] sm:$0xff]
        %v301 = vld [vmem:[%s148 + $0x3a8] sm:$0xff]
        %v302 = vld [vmem:[%s148 + $0x3b0] sm:$0xff]
        %v303 = vld [vmem:[%s148 + $0x3b8] sm:$0xff]
        %v304 = vld [vmem:[%s148 + $0x3c0] sm:$0xff]
        %v305 = vld [vmem:[%s148 + $0x3c8] sm:$0xff]
        %v306 = vld [vmem:[%s148 + $0x3d0] sm:$0xff]
        %v307 = vld [vmem:[%s148 + $0x3d8] sm:$0xff]
        %v308 = vld [vmem:[%s148 + $0x3e0] sm:$0xff]
        %v309 = vld [vmem:[%s148 + $0x3e8] sm:$0xff]
        %v310 = vld [vmem:[%s148 + $0x3f0] sm:$0xff]
        %v311 = vld [vmem:[%s148 + $0x3f8] sm:$0xff]
        %v312 = vld [vmem:[%s148 + $0x400] sm:$0xff]
        %v313 = vld [vmem:[%s148 + $0x408] sm:$0xff]
        %v314 = vld [vmem:[%s148 + $0x410] sm:$0xff]
        %v315 = vld [vmem:[%s148 + $0x418] sm:$0xff]
        %v316 = vld [vmem:[%s148 + $0x420] sm:$0xff]
        %v317 = vld [vmem:[%s148 + $0x428] sm:$0xff]
        %v318 = vld [vmem:[%s148 + $0x430] sm:$0xff]
        %v319 = vld [vmem:[%s148 + $0x438] sm:$0xff]
        %v320 = vld [vmem:[%s148 + $0x440] sm:$0xff]
        %v321 = vld [vmem:[%s148 + $0x448] sm:$0xff]
        %v322 = vld [vmem:[%s148 + $0x450] sm:$0xff]
        %v323 = vld [vmem:[%s148 + $0x458] sm:$0xff]
        %v324 = vld [vmem:[%s148 + $0x460] sm:$0xff]
        %v325 = vld [vmem:[%s148 + $0x468] sm:$0xff]
        %v326 = vld [vmem:[%s148 + $0x470] sm:$0xff]
        %v327 = vld [vmem:[%s148 + $0x478] sm:$0xff]
        %v328 = vld [vmem:[%s148 + $0x480] sm:$0xff]
        %v329 = vld [vmem:[%s148 + $0x488] sm:$0xff]
        %v330 = vld [vmem:[%s148 + $0x490] sm:$0xff]
        %v331 = vld [vmem:[%s148 + $0x498] sm:$0xff]
        %v332 = vld [vmem:[%s148 + $0x4a0] sm:$0xff]
        %v333 = vld [vmem:[%s148 + $0x4a8] sm:$0xff]
        %v334 = vld [vmem:[%s148 + $0x4b0] sm:$0xff]
        %v335 = vld [vmem:[%s148 + $0x4b8] sm:$0xff]
        %v336 = vld [vmem:[%s148 + $0x4c0] sm:$0xff]
        %v337 = vld [vmem:[%s148 + $0x4c8] sm:$0xff]
        %v338 = vld [vmem:[%s148 + $0x4d0] sm:$0xff]
        %v339 = vld [vmem:[%s148 + $0x4d8] sm:$0xff]
        %v340 = vld [vmem:[%s148 + $0x4e0] sm:$0xff]
        %v341 = vld [vmem:[%s148 + $0x4e8] sm:$0xff]
        %v342 = vld [vmem:[%s148 + $0x4f0] sm:$0xff]
        %v343 = vld [vmem:[%s148 + $0x4f8] sm:$0xff]
        %v344 = vld [vmem:[%s148 + $0x500] sm:$0xff]
        %v345 = vld [vmem:[%s148 + $0x508] sm:$0xff]
        %v346 = vld [vmem:[%s148 + $0x510] sm:$0xff]
        %v347 = vld [vmem:[%s148 + $0x518] sm:$0xff]
        %v348 = vld [vmem:[%s148 + $0x520] sm:$0xff]
        %v349 = vld [vmem:[%s148 + $0x528] sm:$0xff]
        %v350 = vld [vmem:[%s148 + $0x530] sm:$0xff]
        %v351 = vld [vmem:[%s148 + $0x538] sm:$0xff]
        %v352 = vld [vmem:[%s148 + $0x540] sm:$0xff]
        %v353 = vld [vmem:[%s148 + $0x548] sm:$0xff]
        %v354 = vld [vmem:[%s148 + $0x550] sm:$0xff]
        %v355 = vld [vmem:[%s148 + $0x558] sm:$0xff]
        %v356 = vld [vmem:[%s148 + $0x560] sm:$0xff]
        %v357 = vld [vmem:[%s148 + $0x568] sm:$0xff]
        %v358 = vld [vmem:[%s148 + $0x570] sm:$0xff]
        %v359 = vld [vmem:[%s148 + $0x578] sm:$0xff]
        %v360 = vld [vmem:[%s148 + $0x580] sm:$0xff]
        %v361 = vld [vmem:[%s148 + $0x588] sm:$0xff]
        %v362 = vld [vmem:[%s148 + $0x590] sm:$0xff]
        %v363 = vld [vmem:[%s148 + $0x598] sm:$0xff]
        %v364 = vld [vmem:[%s148 + $0x5a0] sm:$0xff]
        %v365 = vld [vmem:[%s148 + $0x5a8] sm:$0xff]
        %v366 = vld [vmem:[%s148 + $0x5b0] sm:$0xff]
        %v367 = vld [vmem:[%s148 + $0x5b8] sm:$0xff]
        %v368 = vld [vmem:[%s148 + $0x5c0] sm:$0xff]
        %v369 = vld [vmem:[%s148 + $0x5c8] sm:$0xff]
        %v370 = vld [vmem:[%s148 + $0x5d0] sm:$0xff]
        %v371 = vld [vmem:[%s148 + $0x5d8] sm:$0xff]
        %v372 = vld [vmem:[%s148 + $0x5e0] sm:$0xff]
        %v373 = vld [vmem:[%s148 + $0x5e8] sm:$0xff]
        %v374 = vld [vmem:[%s148 + $0x5f0] sm:$0xff]
        %v375 = vld [vmem:[%s148 + $0x5f8] sm:$0xff]
        %v376 = vld [vmem:[%s148 + $0x600] sm:$0xff]
        %v377 = vld [vmem:[%s148 + $0x608] sm:$0xff]
        %v378 = vld [vmem:[%s148 + $0x610] sm:$0xff]
        %v379 = vld [vmem:[%s148 + $0x618] sm:$0xff]
        %v380 = vld [vmem:[%s148 + $0x620] sm:$0xff]
        %v381 = vld [vmem:[%s148 + $0x628] sm:$0xff]
        %v382 = vld [vmem:[%s148 + $0x630] sm:$0xff]
        %v383 = vld [vmem:[%s148 + $0x638] sm:$0xff]
        %v384 = vld [vmem:[%s148 + $0x640] sm:$0xff]
        %v385 = vld [vmem:[%s148 + $0x648] sm:$0xff]
        %v386 = vld [vmem:[%s148 + $0x650] sm:$0xff]
        %v387 = vld [vmem:[%s148 + $0x658] sm:$0xff]
        %v388 = vld [vmem:[%s148 + $0x660] sm:$0xff]
        %v389 = vld [vmem:[%s148 + $0x668] sm:$0xff]
        %v390 = vld [vmem:[%s148 + $0x670] sm:$0xff]
        %v391 = vld [vmem:[%s148 + $0x678] sm:$0xff]
        %v392 = vld [vmem:[%s148 + $0x680] sm:$0xff]
        %v393 = vld [vmem:[%s148 + $0x688] sm:$0xff]
        %v394 = vld [vmem:[%s148 + $0x690] sm:$0xff]
        %v395 = vld [vmem:[%s148 + $0x698] sm:$0xff]
        %v396 = vld [vmem:[%s148 + $0x6a0] sm:$0xff]
        %v397 = vld [vmem:[%s148 + $0x6a8] sm:$0xff]
        %v398 = vld [vmem:[%s148 + $0x6b0] sm:$0xff]
        %v399 = vld [vmem:[%s148 + $0x6b8] sm:$0xff]
        %v400 = vld [vmem:[%s148 + $0x6c0] sm:$0xff]
        %v401 = vld [vmem:[%s148 + $0x6c8] sm:$0xff]
        %v402 = vld [vmem:[%s148 + $0x6d0] sm:$0xff]
        %v403 = vld [vmem:[%s148 + $0x6d8] sm:$0xff]
        %v404 = vld [vmem:[%s148 + $0x6e0] sm:$0xff]
        %v405 = vld [vmem:[%s148 + $0x6e8] sm:$0xff]
        %v406 = vld [vmem:[%s148 + $0x6f0] sm:$0xff]
        %v407 = vld [vmem:[%s148 + $0x6f8] sm:$0xff]
        %v408 = vld [vmem:[%s148 + $0x700] sm:$0xff]
        %v409 = vld [vmem:[%s148 + $0x708] sm:$0xff]
        %v410 = vld [vmem:[%s148 + $0x710] sm:$0xff]
        %v411 = vld [vmem:[%s148 + $0x718] sm:$0xff]
        %v412 = vld [vmem:[%s148 + $0x720] sm:$0xff]
        %v413 = vld [vmem:[%s148 + $0x728] sm:$0xff]
        %v414 = vld [vmem:[%s148 + $0x730] sm:$0xff]
        %v415 = vld [vmem:[%s148 + $0x738] sm:$0xff]
        %v416 = vld [vmem:[%s148 + $0x740] sm:$0xff]
        %v417 = vld [vmem:[%s148 + $0x748] sm:$0xff]
        %v418 = vld [vmem:[%s148 + $0x750] sm:$0xff]
        %v419 = vld [vmem:[%s148 + $0x758] sm:$0xff]
        %v420 = vld [vmem:[%s148 + $0x760] sm:$0xff]
        %v421 = vld [vmem:[%s148 + $0x768] sm:$0xff]
        %v422 = vld [vmem:[%s148 + $0x770] sm:$0xff]
        %v423 = vld [vmem:[%s148 + $0x778] sm:$0xff]
        %v424 = vld [vmem:[%s148 + $0x780] sm:$0xff]
        %v425 = vld [vmem:[%s148 + $0x788] sm:$0xff]
        %v426 = vld [vmem:[%s148 + $0x790] sm:$0xff]
        %v427 = vld [vmem:[%s148 + $0x798] sm:$0xff]
        %v428 = vld [vmem:[%s148 + $0x7a0] sm:$0xff]
        %v429 = vld [vmem:[%s148 + $0x7a8] sm:$0xff]
        %v430 = vld [vmem:[%s148 + $0x7b0] sm:$0xff]
        %v431 = vld [vmem:[%s148 + $0x7b8] sm:$0xff]
        %v432 = vld [vmem:[%s148 + $0x7c0] sm:$0xff]
        %v433 = vld [vmem:[%s148 + $0x7c8] sm:$0xff]
        %v434 = vld [vmem:[%s148 + $0x7d0] sm:$0xff]
        %v435 = vld [vmem:[%s148 + $0x7d8] sm:$0xff]
        %v436 = vld [vmem:[%s148 + $0x7e0] sm:$0xff]
        %v437 = vld [vmem:[%s148 + $0x7e8] sm:$0xff]
        %v438 = vld [vmem:[%s148 + $0x7f0] sm:$0xff]
        %v439 = vld [vmem:[%s148 + $0x7f8] sm:$0xff]
        %v440 = vld [vmem:[%s148 + $0x800] sm:$0xff]
        %v441 = vld [vmem:[%s148 + $0x808] sm:$0xff]
        %v442 = vld [vmem:[%s148 + $0x810] sm:$0xff]
        %v443 = vld [vmem:[%s148 + $0x818] sm:$0xff]
        %v444 = vld [vmem:[%s148 + $0x820] sm:$0xff]
        %v445 = vld [vmem:[%s148 + $0x828] sm:$0xff]
        %v446 = vld [vmem:[%s148 + $0x830] sm:$0xff]
        %v447 = vld [vmem:[%s148 + $0x838] sm:$0xff]
        %v448 = vld [vmem:[%s148 + $0x840] sm:$0xff]
        %v449 = vld [vmem:[%s148 + $0x848] sm:$0xff]
        %v450 = vld [vmem:[%s148 + $0x850] sm:$0xff]
        %v451 = vld [vmem:[%s148 + $0x858] sm:$0xff]
        %v452 = vld [vmem:[%s148 + $0x860] sm:$0xff]
        %v453 = vld [vmem:[%s148 + $0x868] sm:$0xff]
        %v454 = vld [vmem:[%s148 + $0x870] sm:$0xff]
        %v455 = vld [vmem:[%s148 + $0x878] sm:$0xff]
        %v456 = vld [vmem:[%s148 + $0x880] sm:$0xff]
        %v457 = vld [vmem:[%s148 + $0x888] sm:$0xff]
        %v458 = vld [vmem:[%s148 + $0x890] sm:$0xff]
        %v459 = vld [vmem:[%s148 + $0x898] sm:$0xff]
        %v460 = vld [vmem:[%s148 + $0x8a0] sm:$0xff]
        %v461 = vld [vmem:[%s148 + $0x8a8] sm:$0xff]
        %v462 = vld [vmem:[%s148 + $0x8b0] sm:$0xff]
        %v463 = vld [vmem:[%s148 + $0x8b8] sm:$0xff]
        %v464 = vld [vmem:[%s148 + $0x8c0] sm:$0xff]
        %v465 = vld [vmem:[%s148 + $0x8c8] sm:$0xff]
        %v466 = vld [vmem:[%s148 + $0x8d0] sm:$0xff]
        %v467 = vld [vmem:[%s148 + $0x8d8] sm:$0xff]
        %v468 = vld [vmem:[%s148 + $0x8e0] sm:$0xff]
        %v469 = vld [vmem:[%s148 + $0x8e8] sm:$0xff]
        %v470 = vld [vmem:[%s148 + $0x8f0] sm:$0xff]
        %v471 = vld [vmem:[%s148 + $0x8f8] sm:$0xff]
        %v472 = vld [vmem:[%s148 + $0x900] sm:$0xff]
        %v473 = vld [vmem:[%s148 + $0x908] sm:$0xff]
        %v474 = vld [vmem:[%s148 + $0x910] sm:$0xff]
        %v475 = vld [vmem:[%s148 + $0x918] sm:$0xff]
        %v476 = vld [vmem:[%s148 + $0x920] sm:$0xff]
        %v477 = vld [vmem:[%s148 + $0x928] sm:$0xff]
        %v478 = vld [vmem:[%s148 + $0x930] sm:$0xff]
        %v479 = vld [vmem:[%s148 + $0x938] sm:$0xff]
        %v480 = vld [vmem:[%s148 + $0x940] sm:$0xff]
        %v481 = vld [vmem:[%s148 + $0x948] sm:$0xff]
        %v482 = vld [vmem:[%s148 + $0x950] sm:$0xff]
        %v483 = vld [vmem:[%s148 + $0x958] sm:$0xff]
        %v484 = vld [vmem:[%s148 + $0x960] sm:$0xff]
        %v485 = vld [vmem:[%s148 + $0x968] sm:$0xff]
        %v486 = vld [vmem:[%s148 + $0x970] sm:$0xff]
        %v487 = vld [vmem:[%s148 + $0x978] sm:$0xff]
        %v488 = vld [vmem:[%s148 + $0x980] sm:$0xff]
        %v489 = vld [vmem:[%s148 + $0x988] sm:$0xff]
        %v490 = vld [vmem:[%s148 + $0x990] sm:$0xff]
        %v491 = vld [vmem:[%s148 + $0x998] sm:$0xff]
        %v492 = vld [vmem:[%s148 + $0x9a0] sm:$0xff]
        %v493 = vld [vmem:[%s148 + $0x9a8] sm:$0xff]
        %v494 = vld [vmem:[%s148 + $0x9b0] sm:$0xff]
        %v495 = vld [vmem:[%s148 + $0x9b8] sm:$0xff]
        %v496 = vld [vmem:[%s148 + $0x9c0] sm:$0xff]
        %v497 = vld [vmem:[%s148 + $0x9c8] sm:$0xff]
        %v498 = vld [vmem:[%s148 + $0x9d0] sm:$0xff]
        %v499 = vld [vmem:[%s148 + $0x9d8] sm:$0xff]
        %v500 = vld [vmem:[%s148 + $0x9e0] sm:$0xff]
        %v501 = vld [vmem:[%s148 + $0x9e8] sm:$0xff]
        %v502 = vld [vmem:[%s148 + $0x9f0] sm:$0xff]
        %v503 = vld [vmem:[%s148 + $0x9f8] sm:$0xff]
        %v504 = vld [vmem:[%s148 + $0xa00] sm:$0xff]
        %v505 = vld [vmem:[%s148 + $0xa08] sm:$0xff]
        %v506 = vld [vmem:[%s148 + $0xa10] sm:$0xff]
        %v507 = vld [vmem:[%s148 + $0xa18] sm:$0xff]
        %v508 = vld [vmem:[%s148 + $0xa20] sm:$0xff]
        %v509 = vld [vmem:[%s148 + $0xa28] sm:$0xff]
        %v510 = vld [vmem:[%s148 + $0xa30] sm:$0xff]
        %v511 = vld [vmem:[%s148 + $0xa38] sm:$0xff]
        %v512 = vld [vmem:[%s148 + $0xa40] sm:$0xff]
        %v513 = vld [vmem:[%s148 + $0xa48] sm:$0xff]
        %v514 = vld [vmem:[%s148 + $0xa50] sm:$0xff]
        %v515 = vld [vmem:[%s148 + $0xa58] sm:$0xff]
        %v516 = vld [vmem:[%s148 + $0xa60] sm:$0xff]
        %v517 = vld [vmem:[%s148 + $0xa68] sm:$0xff]
        %v518 = vld [vmem:[%s148 + $0xa70] sm:$0xff]
        %v519 = vld [vmem:[%s148 + $0xa78] sm:$0xff]
        %v520 = vld [vmem:[%s148 + $0xa80] sm:$0xff]
        %v521 = vld [vmem:[%s148 + $0xa88] sm:$0xff]
        %v522 = vld [vmem:[%s148 + $0xa90] sm:$0xff]
        %v523 = vld [vmem:[%s148 + $0xa98] sm:$0xff]
        %v524 = vld [vmem:[%s148 + $0xaa0] sm:$0xff]
        %v525 = vld [vmem:[%s148 + $0xaa8] sm:$0xff]
        %v526 = vld [vmem:[%s148 + $0xab0] sm:$0xff]
        %v527 = vld [vmem:[%s148 + $0xab8] sm:$0xff]
        %v528 = vld [vmem:[%s148 + $0xac0] sm:$0xff]
        %v529 = vld [vmem:[%s148 + $0xac8] sm:$0xff]
        %v530 = vld [vmem:[%s148 + $0xad0] sm:$0xff]
        %v531 = vld [vmem:[%s148 + $0xad8] sm:$0xff]
        %v532 = vld [vmem:[%s148 + $0xae0] sm:$0xff]
        %v533 = vld [vmem:[%s148 + $0xae8] sm:$0xff]
        %v534 = vld [vmem:[%s148 + $0xaf0] sm:$0xff]
        %v535 = vld [vmem:[%s148 + $0xaf8] sm:$0xff]
        %v536 = vld [vmem:[%s148 + $0xb00] sm:$0xff]
        %v537 = vld [vmem:[%s148 + $0xb08] sm:$0xff]
        %v538 = vld [vmem:[%s148 + $0xb10] sm:$0xff]
        %v539 = vld [vmem:[%s148 + $0xb18] sm:$0xff]
        %v540 = vld [vmem:[%s148 + $0xb20] sm:$0xff]
        %v541 = vld [vmem:[%s148 + $0xb28] sm:$0xff]
        %v542 = vld [vmem:[%s148 + $0xb30] sm:$0xff]
        %v543 = vld [vmem:[%s148 + $0xb38] sm:$0xff]
        %v544 = vld [vmem:[%s148 + $0xb40] sm:$0xff]
        %v545 = vld [vmem:[%s148 + $0xb48] sm:$0xff]
        %v546 = vld [vmem:[%s148 + $0xb50] sm:$0xff]
        %v547 = vld [vmem:[%s148 + $0xb58] sm:$0xff]
        %v548 = vld [vmem:[%s148 + $0xb60] sm:$0xff]
        %v549 = vld [vmem:[%s148 + $0xb68] sm:$0xff]
        %v550 = vld [vmem:[%s148 + $0xb70] sm:$0xff]
        %v551 = vld [vmem:[%s148 + $0xb78] sm:$0xff]
        %v552 = vld [vmem:[%s148 + $0xb80] sm:$0xff]
        %v553 = vld [vmem:[%s148 + $0xb88] sm:$0xff]
        %v554 = vld [vmem:[%s148 + $0xb90] sm:$0xff]
        %v555 = vld [vmem:[%s148 + $0xb98] sm:$0xff]
        %v556 = vld [vmem:[%s148 + $0xba0] sm:$0xff]
        %v557 = vld [vmem:[%s148 + $0xba8] sm:$0xff]
        %v558 = vld [vmem:[%s148 + $0xbb0] sm:$0xff]
        %v559 = vld [vmem:[%s148 + $0xbb8] sm:$0xff]
        %v560 = vld [vmem:[%s148 + $0xbc0] sm:$0xff]
        %v561 = vld [vmem:[%s148 + $0xbc8] sm:$0xff]
        %v562 = vld [vmem:[%s148 + $0xbd0] sm:$0xff]
        %v563 = vld [vmem:[%s148 + $0xbd8] sm:$0xff]
        %v564 = vld [vmem:[%s148 + $0xbe0] sm:$0xff]
        %v565 = vld [vmem:[%s148 + $0xbe8] sm:$0xff]
        %v566 = vld [vmem:[%s148 + $0xbf0] sm:$0xff]
        %v567 = vld [vmem:[%s148 + $0xbf8] sm:$0xff]
        %vm568 = vcmask 523264
        %v570 = vsel %vm568, %v183, 0
        %572 = vmatprep.subr.mxu0 %v425
        %573 = vmatpush1.msra.mxu0 %v424
        %574 = vmatprep.subr.mxu0 %v409
        %575 = vmatpush1.msra.mxu0 %v408
        %576 = vmatprep.subr.mxu0 %v393
        %577 = vmatpush1.msra.mxu0 %v392
        %578 = vmatprep.subr.mxu0 %v377
        %579 = vmatpush1.msra.mxu0 %v376
        %580 = vmatprep.subr.mxu0 %v361
        %581 = vmatpush1.msra.mxu0 %v360
        %582 = vmatprep.subr.mxu0 %v345
        %583 = vmatpush1.msra.mxu0 %v344
        %584 = vmatprep.subr.mxu0 %v329
        %585 = vmatpush1.msra.mxu0 %v328
        %586 = vmatprep.subr.mxu0 %v313
        %587 = vmatpush1.msra.mxu0 %v312
        %588 = vmatprep.subr.mxu0 %v297
        %589 = vmatpush1.msra.mxu0 %v296
        %590 = vmatprep.subr.mxu0 %v281
        %591 = vmatpush1.msra.mxu0 %v280
        %592 = vmatprep.subr.mxu0 %v265
        %593 = vmatpush1.msra.mxu0 %v264
        %594 = vmatprep.subr.mxu0 %v249
        %595 = vmatpush1.msra.mxu0 %v248
        %596 = vmatprep.subr.mxu0 %v233
        %597 = vmatpush1.msra.mxu0 %v232
        %598 = vmatprep.subr.mxu0 %v217
        %599 = vmatpush1.msra.mxu0 %v216
        %600 = vmatprep.subr.mxu0 %v201
        %601 = vmatpush1.msra.mxu0 %v200
        %602 = vmatprep.subr.mxu0 %v185
        %603 = vmatpush1.msra.mxu0 %v184
        %604 = vmatprep.subr.mxu0 0.0
        %605 = vmatpush2.msra.mxu0 0.0
        %606 = vmatprep.subr.mxu0 0.0
        %607 = vmatpush2.msra.mxu0 0.0
        %608 = vmatprep.subr.mxu0 0.0
        %609 = vmatpush2.msra.mxu0 0.0
        %610 = vmatprep.subr.mxu0 0.0
        %611 = vmatpush2.msra.mxu0 0.0
        %612 = vmatprep.subr.mxu0 0.0
        %613 = vmatpush2.msra.mxu0 0.0
        %614 = vmatprep.subr.mxu0 0.0
        %615 = vmatpush2.msra.mxu0 0.0
        %616 = vmatprep.subr.mxu0 0.0
        %617 = vmatpush2.msra.mxu0 0.0
        %618 = vmatprep.subr.mxu0 0.0
        %619 = vmatpush2.msra.mxu0 0.0
        %620 = vmatprep.subr.mxu0 %v553
        %621 = vmatpush2.msra.mxu0 %v552
        %622 = vmatprep.subr.mxu0 %v537
        %623 = vmatpush2.msra.mxu0 %v536
        %624 = vmatprep.subr.mxu0 %v521
        %625 = vmatpush2.msra.mxu0 %v520
        %626 = vmatprep.subr.mxu0 %v505
        %627 = vmatpush2.msra.mxu0 %v504
        %628 = vmatprep.subr.mxu0 %v489
        %629 = vmatpush2.msra.mxu0 %v488
        %630 = vmatprep.subr.mxu0 %v473
        %631 = vmatpush2.msra.mxu0 %v472
        %632 = vmatprep.subr.mxu0 %v457
        %633 = vmatpush2.msra.mxu0 %v456
        %634 = vmatprep.subr.mxu0 %v441
        %635 = vmatpush2.msra.mxu0 %v440
        %636 = vmatprep.mubr.f32.mxu0 %v570
        %637 = vmatmul.mubr.f32.gmra.mxu0 %v182
        %v638 = vpop.f32.mrf.mxu0
        %v639 = vadd.f32 0.0, %v638
        %v640 = vpop.f32.mrf.mxu0
        %v641 = vadd.f32 0.0, %v640
        %642 = vdwg.mxu0
        %643 = vmatprep.subr.mxu0 %v427
        %644 = vmatpush1.msra.mxu0 %v426
        %645 = vmatprep.subr.mxu0 %v411
        %646 = vmatpush1.msra.mxu0 %v410
        %647 = vmatprep.subr.mxu0 %v395
        %648 = vmatpush1.msra.mxu0 %v394
        %649 = vmatprep.subr.mxu0 %v379
        %650 = vmatpush1.msra.mxu0 %v378
        %651 = vmatprep.subr.mxu0 %v363
        %652 = vmatpush1.msra.mxu0 %v362
        %653 = vmatprep.subr.mxu0 %v347
        %654 = vmatpush1.msra.mxu0 %v346
        %655 = vmatprep.subr.mxu0 %v331
        %656 = vmatpush1.msra.mxu0 %v330
        %657 = vmatprep.subr.mxu0 %v315
        %658 = vmatpush1.msra.mxu0 %v314
        %659 = vmatprep.subr.mxu0 %v299
        %660 = vmatpush1.msra.mxu0 %v298
        %661 = vmatprep.subr.mxu0 %v283
        %662 = vmatpush1.msra.mxu0 %v282
        %663 = vmatprep.subr.mxu0 %v267
        %664 = vmatpush1.msra.mxu0 %v266
        %665 = vmatprep.subr.mxu0 %v251
        %666 = vmatpush1.msra.mxu0 %v250
        %667 = vmatprep.subr.mxu0 %v235
        %668 = vmatpush1.msra.mxu0 %v234
        %669 = vmatprep.subr.mxu0 %v219
        %670 = vmatpush1.msra.mxu0 %v218
        %671 = vmatprep.subr.mxu0 %v203
        %672 = vmatpush1.msra.mxu0 %v202
        %673 = vmatprep.subr.mxu0 %v187
        %674 = vmatpush1.msra.mxu0 %v186
        %675 = vmatprep.subr.mxu0 0.0
        %676 = vmatpush2.msra.mxu0 0.0
        %677 = vmatprep.subr.mxu0 0.0
        %678 = vmatpush2.msra.mxu0 0.0
        %679 = vmatprep.subr.mxu0 0.0
        %680 = vmatpush2.msra.mxu0 0.0
        %681 = vmatprep.subr.mxu0 0.0
        %682 = vmatpush2.msra.mxu0 0.0
        %683 = vmatprep.subr.mxu0 0.0
        %684 = vmatpush2.msra.mxu0 0.0
        %685 = vmatprep.subr.mxu0 0.0
        %686 = vmatpush2.msra.mxu0 0.0
        %687 = vmatprep.subr.mxu0 0.0
        %688 = vmatpush2.msra.mxu0 0.0
        %689 = vmatprep.subr.mxu0 0.0
        %690 = vmatpush2.msra.mxu0 0.0
        %691 = vmatprep.subr.mxu0 %v555
        %692 = vmatpush2.msra.mxu0 %v554
        %693 = vmatprep.subr.mxu0 %v539
        %694 = vmatpush2.msra.mxu0 %v538
        %695 = vmatprep.subr.mxu0 %v523
        %696 = vmatpush2.msra.mxu0 %v522
        %697 = vmatprep.subr.mxu0 %v507
        %698 = vmatpush2.msra.mxu0 %v506
        %699 = vmatprep.subr.mxu0 %v491
        %700 = vmatpush2.msra.mxu0 %v490
        %701 = vmatprep.subr.mxu0 %v475
        %702 = vmatpush2.msra.mxu0 %v474
        %703 = vmatprep.subr.mxu0 %v459
        %704 = vmatpush2.msra.mxu0 %v458
        %705 = vmatprep.subr.mxu0 %v443
        %706 = vmatpush2.msra.mxu0 %v442
        %707 = vmatprep.mubr.f32.mxu0 %v570
        %708 = vmatmul.mubr.f32.gmra.mxu0 %v182
        %v709 = vpop.f32.mrf.mxu0
        %v710 = vadd.f32 0.0, %v709
        %v711 = vpop.f32.mrf.mxu0
        %v712 = vadd.f32 0.0, %v711
        %713 = vdwg.mxu0
        %714 = vmatprep.subr.mxu0 %v429
        %715 = vmatpush1.msra.mxu0 %v428
        %716 = vmatprep.subr.mxu0 %v413
        %717 = vmatpush1.msra.mxu0 %v412
        %718 = vmatprep.subr.mxu0 %v397
        %719 = vmatpush1.msra.mxu0 %v396
        %720 = vmatprep.subr.mxu0 %v381
        %721 = vmatpush1.msra.mxu0 %v380
        %722 = vmatprep.subr.mxu0 %v365
        %723 = vmatpush1.msra.mxu0 %v364
        %724 = vmatprep.subr.mxu0 %v349
        %725 = vmatpush1.msra.mxu0 %v348
        %726 = vmatprep.subr.mxu0 %v333
        %727 = vmatpush1.msra.mxu0 %v332
        %728 = vmatprep.subr.mxu0 %v317
        %729 = vmatpush1.msra.mxu0 %v316
        %730 = vmatprep.subr.mxu0 %v301
        %731 = vmatpush1.msra.mxu0 %v300
        %732 = vmatprep.subr.mxu0 %v285
        %733 = vmatpush1.msra.mxu0 %v284
        %734 = vmatprep.subr.mxu0 %v269
        %735 = vmatpush1.msra.mxu0 %v268
        %736 = vmatprep.subr.mxu0 %v253
        %737 = vmatpush1.msra.mxu0 %v252
        %738 = vmatprep.subr.mxu0 %v237
        %739 = vmatpush1.msra.mxu0 %v236
        %740 = vmatprep.subr.mxu0 %v221
        %741 = vmatpush1.msra.mxu0 %v220
        %742 = vmatprep.subr.mxu0 %v205
        %743 = vmatpush1.msra.mxu0 %v204
        %744 = vmatprep.subr.mxu0 %v189
        %745 = vmatpush1.msra.mxu0 %v188
        %746 = vmatprep.subr.mxu0 0.0
        %747 = vmatpush2.msra.mxu0 0.0
        %748 = vmatprep.subr.mxu0 0.0
        %749 = vmatpush2.msra.mxu0 0.0
        %750 = vmatprep.subr.mxu0 0.0
        %751 = vmatpush2.msra.mxu0 0.0
        %752 = vmatprep.subr.mxu0 0.0
        %753 = vmatpush2.msra.mxu0 0.0
        %754 = vmatprep.subr.mxu0 0.0
        %755 = vmatpush2.msra.mxu0 0.0
        %756 = vmatprep.subr.mxu0 0.0
        %757 = vmatpush2.msra.mxu0 0.0
        %758 = vmatprep.subr.mxu0 0.0
        %759 = vmatpush2.msra.mxu0 0.0
        %760 = vmatprep.subr.mxu0 0.0
        %761 = vmatpush2.msra.mxu0 0.0
        %762 = vmatprep.subr.mxu0 %v557
        %763 = vmatpush2.msra.mxu0 %v556
        %764 = vmatprep.subr.mxu0 %v541
        %765 = vmatpush2.msra.mxu0 %v540
        %766 = vmatprep.subr.mxu0 %v525
        %767 = vmatpush2.msra.mxu0 %v524
        %768 = vmatprep.subr.mxu0 %v509
        %769 = vmatpush2.msra.mxu0 %v508
        %770 = vmatprep.subr.mxu0 %v493
        %771 = vmatpush2.msra.mxu0 %v492
        %772 = vmatprep.subr.mxu0 %v477
        %773 = vmatpush2.msra.mxu0 %v476
        %774 = vmatprep.subr.mxu0 %v461
        %775 = vmatpush2.msra.mxu0 %v460
        %776 = vmatprep.subr.mxu0 %v445
        %777 = vmatpush2.msra.mxu0 %v444
        %778 = vmatprep.mubr.f32.mxu0 %v570
        %779 = vmatmul.mubr.f32.gmra.mxu0 %v182
        %v780 = vpop.f32.mrf.mxu0
        %v781 = vadd.f32 0.0, %v780
        %v782 = vpop.f32.mrf.mxu0
        %v783 = vadd.f32 0.0, %v782
        %784 = vdwg.mxu0
        %785 = vmatprep.subr.mxu0 %v431
        %786 = vmatpush1.msra.mxu0 %v430
        %787 = vmatprep.subr.mxu0 %v415
        %788 = vmatpush1.msra.mxu0 %v414
        %789 = vmatprep.subr.mxu0 %v399
        %790 = vmatpush1.msra.mxu0 %v398
        %791 = vmatprep.subr.mxu0 %v383
        %792 = vmatpush1.msra.mxu0 %v382
        %793 = vmatprep.subr.mxu0 %v367
        %794 = vmatpush1.msra.mxu0 %v366
        %795 = vmatprep.subr.mxu0 %v351
        %796 = vmatpush1.msra.mxu0 %v350
        %797 = vmatprep.subr.mxu0 %v335
        %798 = vmatpush1.msra.mxu0 %v334
        %799 = vmatprep.subr.mxu0 %v319
        %800 = vmatpush1.msra.mxu0 %v318
        %801 = vmatprep.subr.mxu0 %v303
        %802 = vmatpush1.msra.mxu0 %v302
        %803 = vmatprep.subr.mxu0 %v287
        %804 = vmatpush1.msra.mxu0 %v286
        %805 = vmatprep.subr.mxu0 %v271
        %806 = vmatpush1.msra.mxu0 %v270
        %807 = vmatprep.subr.mxu0 %v255
        %808 = vmatpush1.msra.mxu0 %v254
        %809 = vmatprep.subr.mxu0 %v239
        %810 = vmatpush1.msra.mxu0 %v238
        %811 = vmatprep.subr.mxu0 %v223
        %812 = vmatpush1.msra.mxu0 %v222
        %813 = vmatprep.subr.mxu0 %v207
        %814 = vmatpush1.msra.mxu0 %v206
        %815 = vmatprep.subr.mxu0 %v191
        %816 = vmatpush1.msra.mxu0 %v190
        %817 = vmatprep.subr.mxu0 0.0
        %818 = vmatpush2.msra.mxu0 0.0
        %819 = vmatprep.subr.mxu0 0.0
        %820 = vmatpush2.msra.mxu0 0.0
        %821 = vmatprep.subr.mxu0 0.0
        %822 = vmatpush2.msra.mxu0 0.0
        %823 = vmatprep.subr.mxu0 0.0
        %824 = vmatpush2.msra.mxu0 0.0
        %825 = vmatprep.subr.mxu0 0.0
        %826 = vmatpush2.msra.mxu0 0.0
        %827 = vmatprep.subr.mxu0 0.0
        %828 = vmatpush2.msra.mxu0 0.0
        %829 = vmatprep.subr.mxu0 0.0
        %830 = vmatpush2.msra.mxu0 0.0
        %831 = vmatprep.subr.mxu0 0.0
        %832 = vmatpush2.msra.mxu0 0.0
        %833 = vmatprep.subr.mxu0 %v559
        %834 = vmatpush2.msra.mxu0 %v558
        %835 = vmatprep.subr.mxu0 %v543
        %836 = vmatpush2.msra.mxu0 %v542
        %837 = vmatprep.subr.mxu0 %v527
        %838 = vmatpush2.msra.mxu0 %v526
        %839 = vmatprep.subr.mxu0 %v511
        %840 = vmatpush2.msra.mxu0 %v510
        %841 = vmatprep.subr.mxu0 %v495
        %842 = vmatpush2.msra.mxu0 %v494
        %843 = vmatprep.subr.mxu0 %v479
        %844 = vmatpush2.msra.mxu0 %v478
        %845 = vmatprep.subr.mxu0 %v463
        %846 = vmatpush2.msra.mxu0 %v462
        %847 = vmatprep.subr.mxu0 %v447
        %848 = vmatpush2.msra.mxu0 %v446
        %849 = vmatprep.mubr.f32.mxu0 %v570
        %850 = vmatmul.mubr.f32.gmra.mxu0 %v182
        %v851 = vpop.f32.mrf.mxu0
        %v852 = vadd.f32 0.0, %v851
        %v853 = vpop.f32.mrf.mxu0
        %v854 = vadd.f32 0.0, %v853
        %855 = vdwg.mxu0
        %856 = vmatprep.subr.mxu0 %v433
        %857 = vmatpush1.msra.mxu0 %v432
        %858 = vmatprep.subr.mxu0 %v417
        %859 = vmatpush1.msra.mxu0 %v416
        %860 = vmatprep.subr.mxu0 %v401
        %861 = vmatpush1.msra.mxu0 %v400
        %862 = vmatprep.subr.mxu0 %v385
        %863 = vmatpush1.msra.mxu0 %v384
        %864 = vmatprep.subr.mxu0 %v369
        %865 = vmatpush1.msra.mxu0 %v368
        %866 = vmatprep.subr.mxu0 %v353
        %867 = vmatpush1.msra.mxu0 %v352
        %868 = vmatprep.subr.mxu0 %v337
        %869 = vmatpush1.msra.mxu0 %v336
        %870 = vmatprep.subr.mxu0 %v321
        %871 = vmatpush1.msra.mxu0 %v320
        %872 = vmatprep.subr.mxu0 %v305
        %873 = vmatpush1.msra.mxu0 %v304
        %874 = vmatprep.subr.mxu0 %v289
        %875 = vmatpush1.msra.mxu0 %v288
        %876 = vmatprep.subr.mxu0 %v273
        %877 = vmatpush1.msra.mxu0 %v272
        %878 = vmatprep.subr.mxu0 %v257
        %879 = vmatpush1.msra.mxu0 %v256
        %880 = vmatprep.subr.mxu0 %v241
        %881 = vmatpush1.msra.mxu0 %v240
        %882 = vmatprep.subr.mxu0 %v225
        %883 = vmatpush1.msra.mxu0 %v224
        %884 = vmatprep.subr.mxu0 %v209
        %885 = vmatpush1.msra.mxu0 %v208
        %886 = vmatprep.subr.mxu0 %v193
        %887 = vmatpush1.msra.mxu0 %v192
        %888 = vmatprep.subr.mxu0 0.0
        %889 = vmatpush2.msra.mxu0 0.0
        %890 = vmatprep.subr.mxu0 0.0
        %891 = vmatpush2.msra.mxu0 0.0
        %892 = vmatprep.subr.mxu0 0.0
        %893 = vmatpush2.msra.mxu0 0.0
        %894 = vmatprep.subr.mxu0 0.0
        %895 = vmatpush2.msra.mxu0 0.0
        %896 = vmatprep.subr.mxu0 0.0
        %897 = vmatpush2.msra.mxu0 0.0
        %898 = vmatprep.subr.mxu0 0.0
        %899 = vmatpush2.msra.mxu0 0.0
        %900 = vmatprep.subr.mxu0 0.0
        %901 = vmatpush2.msra.mxu0 0.0
        %902 = vmatprep.subr.mxu0 0.0
        %903 = vmatpush2.msra.mxu0 0.0
        %904 = vmatprep.subr.mxu0 %v561
        %905 = vmatpush2.msra.mxu0 %v560
        %906 = vmatprep.subr.mxu0 %v545
        %907 = vmatpush2.msra.mxu0 %v544
        %908 = vmatprep.subr.mxu0 %v529
        %909 = vmatpush2.msra.mxu0 %v528
        %910 = vmatprep.subr.mxu0 %v513
        %911 = vmatpush2.msra.mxu0 %v512
        %912 = vmatprep.subr.mxu0 %v497
        %913 = vmatpush2.msra.mxu0 %v496
        %914 = vmatprep.subr.mxu0 %v481
        %915 = vmatpush2.msra.mxu0 %v480
        %916 = vmatprep.subr.mxu0 %v465
        %917 = vmatpush2.msra.mxu0 %v464
        %918 = vmatprep.subr.mxu0 %v449
        %919 = vmatpush2.msra.mxu0 %v448
        %920 = vmatprep.mubr.f32.mxu0 %v570
        %921 = vmatmul.mubr.f32.gmra.mxu0 %v182
        %v922 = vpop.f32.mrf.mxu0
        %v923 = vadd.f32 0.0, %v922
        %v924 = vpop.f32.mrf.mxu0
        %v925 = vadd.f32 0.0, %v924
        %926 = vdwg.mxu0
        %927 = vmatprep.subr.mxu0 %v435
        %928 = vmatpush1.msra.mxu0 %v434
        %929 = vmatprep.subr.mxu0 %v419
        %930 = vmatpush1.msra.mxu0 %v418
        %931 = vmatprep.subr.mxu0 %v403
        %932 = vmatpush1.msra.mxu0 %v402
        %933 = vmatprep.subr.mxu0 %v387
        %934 = vmatpush1.msra.mxu0 %v386
        %935 = vmatprep.subr.mxu0 %v371
        %936 = vmatpush1.msra.mxu0 %v370
        %937 = vmatprep.subr.mxu0 %v355
        %938 = vmatpush1.msra.mxu0 %v354
        %939 = vmatprep.subr.mxu0 %v339
        %940 = vmatpush1.msra.mxu0 %v338
        %941 = vmatprep.subr.mxu0 %v323
        %942 = vmatpush1.msra.mxu0 %v322
        %943 = vmatprep.subr.mxu0 %v307
        %944 = vmatpush1.msra.mxu0 %v306
        %945 = vmatprep.subr.mxu0 %v291
        %946 = vmatpush1.msra.mxu0 %v290
        %947 = vmatprep.subr.mxu0 %v275
        %948 = vmatpush1.msra.mxu0 %v274
        %949 = vmatprep.subr.mxu0 %v259
        %950 = vmatpush1.msra.mxu0 %v258
        %951 = vmatprep.subr.mxu0 %v243
        %952 = vmatpush1.msra.mxu0 %v242
        %953 = vmatprep.subr.mxu0 %v227
        %954 = vmatpush1.msra.mxu0 %v226
        %955 = vmatprep.subr.mxu0 %v211
        %956 = vmatpush1.msra.mxu0 %v210
        %957 = vmatprep.subr.mxu0 %v195
        %958 = vmatpush1.msra.mxu0 %v194
        %959 = vmatprep.subr.mxu0 0.0
        %960 = vmatpush2.msra.mxu0 0.0
        %961 = vmatprep.subr.mxu0 0.0
        %962 = vmatpush2.msra.mxu0 0.0
        %963 = vmatprep.subr.mxu0 0.0
        %964 = vmatpush2.msra.mxu0 0.0
        %965 = vmatprep.subr.mxu0 0.0
        %966 = vmatpush2.msra.mxu0 0.0
        %967 = vmatprep.subr.mxu0 0.0
        %968 = vmatpush2.msra.mxu0 0.0
        %969 = vmatprep.subr.mxu0 0.0
        %970 = vmatpush2.msra.mxu0 0.0
        %971 = vmatprep.subr.mxu0 0.0
        %972 = vmatpush2.msra.mxu0 0.0
        %973 = vmatprep.subr.mxu0 0.0
        %974 = vmatpush2.msra.mxu0 0.0
        %975 = vmatprep.subr.mxu0 %v563
        %976 = vmatpush2.msra.mxu0 %v562
        %977 = vmatprep.subr.mxu0 %v547
        %978 = vmatpush2.msra.mxu0 %v546
        %979 = vmatprep.subr.mxu0 %v531
        %980 = vmatpush2.msra.mxu0 %v530
        %981 = vmatprep.subr.mxu0 %v515
        %982 = vmatpush2.msra.mxu0 %v514
        %983 = vmatprep.subr.mxu0 %v499
        %984 = vmatpush2.msra.mxu0 %v498
        %985 = vmatprep.subr.mxu0 %v483
        %986 = vmatpush2.msra.mxu0 %v482
        %987 = vmatprep.subr.mxu0 %v467
        %988 = vmatpush2.msra.mxu0 %v466
        %989 = vmatprep.subr.mxu0 %v451
        %990 = vmatpush2.msra.mxu0 %v450
        %991 = vmatprep.mubr.f32.mxu0 %v570
        %992 = vmatmul.mubr.f32.gmra.mxu0 %v182
        %v993 = vpop.f32.mrf.mxu0
        %v994 = vadd.f32 0.0, %v993
        %v995 = vpop.f32.mrf.mxu0
        %v996 = vadd.f32 0.0, %v995
        %997 = vdwg.mxu0
        %998 = vmatprep.subr.mxu0 %v437
        %999 = vmatpush1.msra.mxu0 %v436
        %1000 = vmatprep.subr.mxu0 %v421
        %1001 = vmatpush1.msra.mxu0 %v420
        %1002 = vmatprep.subr.mxu0 %v405
        %1003 = vmatpush1.msra.mxu0 %v404
        %1004 = vmatprep.subr.mxu0 %v389
        %1005 = vmatpush1.msra.mxu0 %v388
        %1006 = vmatprep.subr.mxu0 %v373
        %1007 = vmatpush1.msra.mxu0 %v372
        %1008 = vmatprep.subr.mxu0 %v357
        %1009 = vmatpush1.msra.mxu0 %v356
        %1010 = vmatprep.subr.mxu0 %v341
        %1011 = vmatpush1.msra.mxu0 %v340
        %1012 = vmatprep.subr.mxu0 %v325
        %1013 = vmatpush1.msra.mxu0 %v324
        %1014 = vmatprep.subr.mxu0 %v309
        %1015 = vmatpush1.msra.mxu0 %v308
        %1016 = vmatprep.subr.mxu0 %v293
        %1017 = vmatpush1.msra.mxu0 %v292
        %1018 = vmatprep.subr.mxu0 %v277
        %1019 = vmatpush1.msra.mxu0 %v276
        %1020 = vmatprep.subr.mxu0 %v261
        %1021 = vmatpush1.msra.mxu0 %v260
        %1022 = vmatprep.subr.mxu0 %v245
        %1023 = vmatpush1.msra.mxu0 %v244
        %1024 = vmatprep.subr.mxu0 %v229
        %1025 = vmatpush1.msra.mxu0 %v228
        %1026 = vmatprep.subr.mxu0 %v213
        %1027 = vmatpush1.msra.mxu0 %v212
        %1028 = vmatprep.subr.mxu0 %v197
        %1029 = vmatpush1.msra.mxu0 %v196
        %1030 = vmatprep.subr.mxu0 0.0
        %1031 = vmatpush2.msra.mxu0 0.0
        %1032 = vmatprep.subr.mxu0 0.0
        %1033 = vmatpush2.msra.mxu0 0.0
        %1034 = vmatprep.subr.mxu0 0.0
        %1035 = vmatpush2.msra.mxu0 0.0
        %1036 = vmatprep.subr.mxu0 0.0
        %1037 = vmatpush2.msra.mxu0 0.0
        %1038 = vmatprep.subr.mxu0 0.0
        %1039 = vmatpush2.msra.mxu0 0.0
        %1040 = vmatprep.subr.mxu0 0.0
        %1041 = vmatpush2.msra.mxu0 0.0
        %1042 = vmatprep.subr.mxu0 0.0
        %1043 = vmatpush2.msra.mxu0 0.0
        %1044 = vmatprep.subr.mxu0 0.0
        %1045 = vmatpush2.msra.mxu0 0.0
        %1046 = vmatprep.subr.mxu0 %v565
        %1047 = vmatpush2.msra.mxu0 %v564
        %1048 = vmatprep.subr.mxu0 %v549
        %1049 = vmatpush2.msra.mxu0 %v548
        %1050 = vmatprep.subr.mxu0 %v533
        %1051 = vmatpush2.msra.mxu0 %v532
        %1052 = vmatprep.subr.mxu0 %v517
        %1053 = vmatpush2.msra.mxu0 %v516
        %1054 = vmatprep.subr.mxu0 %v501
        %1055 = vmatpush2.msra.mxu0 %v500
        %1056 = vmatprep.subr.mxu0 %v485
        %1057 = vmatpush2.msra.mxu0 %v484
        %1058 = vmatprep.subr.mxu0 %v469
        %1059 = vmatpush2.msra.mxu0 %v468
        %1060 = vmatprep.subr.mxu0 %v453
        %1061 = vmatpush2.msra.mxu0 %v452
        %1062 = vmatprep.mubr.f32.mxu0 %v570
        %1063 = vmatmul.mubr.f32.gmra.mxu0 %v182
        %v1064 = vpop.f32.mrf.mxu0
        %v1065 = vadd.f32 0.0, %v1064
        %v1066 = vpop.f32.mrf.mxu0
        %v1067 = vadd.f32 0.0, %v1066
        %1068 = vdwg.mxu0
        %1069 = vmatprep.subr.mxu0 %v439
        %1070 = vmatpush1.msra.mxu0 %v438
        %1071 = vmatprep.subr.mxu0 %v423
        %1072 = vmatpush1.msra.mxu0 %v422
        %1073 = vmatprep.subr.mxu0 %v407
        %1074 = vmatpush1.msra.mxu0 %v406
        %1075 = vmatprep.subr.mxu0 %v391
        %1076 = vmatpush1.msra.mxu0 %v390
        %1077 = vmatprep.subr.mxu0 %v375
        %1078 = vmatpush1.msra.mxu0 %v374
        %1079 = vmatprep.subr.mxu0 %v359
        %1080 = vmatpush1.msra.mxu0 %v358
        %1081 = vmatprep.subr.mxu0 %v343
        %1082 = vmatpush1.msra.mxu0 %v342
        %1083 = vmatprep.subr.mxu0 %v327
        %1084 = vmatpush1.msra.mxu0 %v326
        %1085 = vmatprep.subr.mxu0 %v311
        %1086 = vmatpush1.msra.mxu0 %v310
        %1087 = vmatprep.subr.mxu0 %v295
        %1088 = vmatpush1.msra.mxu0 %v294
        %1089 = vmatprep.subr.mxu0 %v279
        %1090 = vmatpush1.msra.mxu0 %v278
        %1091 = vmatprep.subr.mxu0 %v263
        %1092 = vmatpush1.msra.mxu0 %v262
        %1093 = vmatprep.subr.mxu0 %v247
        %1094 = vmatpush1.msra.mxu0 %v246
        %1095 = vmatprep.subr.mxu0 %v231
        %1096 = vmatpush1.msra.mxu0 %v230
        %1097 = vmatprep.subr.mxu0 %v215
        %1098 = vmatpush1.msra.mxu0 %v214
        %1099 = vmatprep.subr.mxu0 %v199
        %1100 = vmatpush1.msra.mxu0 %v198
        %1101 = vmatprep.subr.mxu0 0.0
        %1102 = vmatpush2.msra.mxu0 0.0
        %1103 = vmatprep.subr.mxu0 0.0
        %1104 = vmatpush2.msra.mxu0 0.0
        %1105 = vmatprep.subr.mxu0 0.0
        %1106 = vmatpush2.msra.mxu0 0.0
        %1107 = vmatprep.subr.mxu0 0.0
        %1108 = vmatpush2.msra.mxu0 0.0
        %1109 = vmatprep.subr.mxu0 0.0
        %1110 = vmatpush2.msra.mxu0 0.0
        %1111 = vmatprep.subr.mxu0 0.0
        %1112 = vmatpush2.msra.mxu0 0.0
        %1113 = vmatprep.subr.mxu0 0.0
        %1114 = vmatpush2.msra.mxu0 0.0
        %1115 = vmatprep.subr.mxu0 0.0
        %1116 = vmatpush2.msra.mxu0 0.0
        %1117 = vmatprep.subr.mxu0 %v567
        %1118 = vmatpush2.msra.mxu0 %v566
        %1119 = vmatprep.subr.mxu0 %v551
        %1120 = vmatpush2.msra.mxu0 %v550
        %1121 = vmatprep.subr.mxu0 %v535
        %1122 = vmatpush2.msra.mxu0 %v534
        %1123 = vmatprep.subr.mxu0 %v519
        %1124 = vmatpush2.msra.mxu0 %v518
        %1125 = vmatprep.subr.mxu0 %v503
        %1126 = vmatpush2.msra.mxu0 %v502
        %1127 = vmatprep.subr.mxu0 %v487
        %1128 = vmatpush2.msra.mxu0 %v486
        %1129 = vmatprep.subr.mxu0 %v471
        %1130 = vmatpush2.msra.mxu0 %v470
        %1131 = vmatprep.subr.mxu0 %v455
        %1132 = vmatpush2.msra.mxu0 %v454
        %1133 = vmatprep.mubr.f32.mxu0 %v570
        %1134 = vmatmul.mubr.f32.gmra.mxu0 %v182
        %v1135 = vpop.f32.mrf.mxu0
        %v1136 = vadd.f32 0.0, %v1135
        %v1137 = vpop.f32.mrf.mxu0
        %v1138 = vadd.f32 0.0, %v1137
        %1139 = vdwg.mxu0
        %1140 = vst [vmem:[%s180] sm:$0x3f] %v639
        %1141 = vst [vmem:[%s180 + $0x8] sm:$0x3f] %v641
        %1142 = vst [vmem:[%s180 + $0x10] sm:$0x3f] %v710
        %1143 = vst [vmem:[%s180 + $0x18] sm:$0x3f] %v712
        %1144 = vst [vmem:[%s180 + $0x20] sm:$0x3f] %v781
        %1145 = vst [vmem:[%s180 + $0x28] sm:$0x3f] %v783
        %1146 = vst [vmem:[%s180 + $0x30] sm:$0x3f] %v852
        %1147 = vst [vmem:[%s180 + $0x38] sm:$0x3f] %v854
        %1148 = vst [vmem:[%s180 + $0x40] sm:$0x3f] %v923
        %1149 = vst [vmem:[%s180 + $0x48] sm:$0x3f] %v925
        %1150 = vst [vmem:[%s180 + $0x50] sm:$0x3f] %v994
        %1151 = vst [vmem:[%s180 + $0x58] sm:$0x3f] %v996
        %1152 = vst [vmem:[%s180 + $0x60] sm:$0x3f] %v1065
        %1153 = vst [vmem:[%s180 + $0x68] sm:$0x3f] %v1067
        %1154 = vst [vmem:[%s180 + $0x70] sm:$0x3f] %v1136
        %1155 = vst [vmem:[%s180 + $0x78] sm:$0x3f] %v1138
        %s1156 = scalar_lea.vmem %s148, 3072 [#allocation2]
        %v1157 = vld [vmem:[%s1156] sm:$0xff]
        %v1158 = vld [vmem:[%s1156 + $0x8] sm:$0xff]
        %v1159 = vld [vmem:[%s1156 + $0x10] sm:$0xff]
        %v1160 = vld [vmem:[%s1156 + $0x18] sm:$0xff]
        %v1161 = vld [vmem:[%s1156 + $0x20] sm:$0xff]
        %v1162 = vld [vmem:[%s1156 + $0x28] sm:$0xff]
        %v1163 = vld [vmem:[%s1156 + $0x30] sm:$0xff]
        %v1164 = vld [vmem:[%s1156 + $0x38] sm:$0xff]
        %v1165 = vld [vmem:[%s1156 + $0x40] sm:$0xff]
        %v1166 = vld [vmem:[%s1156 + $0x48] sm:$0xff]
        %v1167 = vld [vmem:[%s1156 + $0x50] sm:$0xff]
        %v1168 = vld [vmem:[%s1156 + $0x58] sm:$0xff]
        %v1169 = vld [vmem:[%s1156 + $0x60] sm:$0xff]
        %v1170 = vld [vmem:[%s1156 + $0x68] sm:$0xff]
        %v1171 = vld [vmem:[%s1156 + $0x70] sm:$0xff]
        %v1172 = vld [vmem:[%s1156 + $0x78] sm:$0xff]
        %v1173 = vld [vmem:[%s1156 + $0x80] sm:$0xff]
        %v1174 = vld [vmem:[%s1156 + $0x88] sm:$0xff]
        %v1175 = vld [vmem:[%s1156 + $0x90] sm:$0xff]
        %v1176 = vld [vmem:[%s1156 + $0x98] sm:$0xff]
        %v1177 = vld [vmem:[%s1156 + $0xa0] sm:$0xff]
        %v1178 = vld [vmem:[%s1156 + $0xa8] sm:$0xff]
        %v1179 = vld [vmem:[%s1156 + $0xb0] sm:$0xff]
        %v1180 = vld [vmem:[%s1156 + $0xb8] sm:$0xff]
        %v1181 = vld [vmem:[%s1156 + $0xc0] sm:$0xff]
        %v1182 = vld [vmem:[%s1156 + $0xc8] sm:$0xff]
        %v1183 = vld [vmem:[%s1156 + $0xd0] sm:$0xff]
        %v1184 = vld [vmem:[%s1156 + $0xd8] sm:$0xff]
        %v1185 = vld [vmem:[%s1156 + $0xe0] sm:$0xff]
        %v1186 = vld [vmem:[%s1156 + $0xe8] sm:$0xff]
        %v1187 = vld [vmem:[%s1156 + $0xf0] sm:$0xff]
        %v1188 = vld [vmem:[%s1156 + $0xf8] sm:$0xff]
        %v1189 = vld [vmem:[%s1156 + $0x100] sm:$0xff]
        %v1190 = vld [vmem:[%s1156 + $0x108] sm:$0xff]
        %v1191 = vld [vmem:[%s1156 + $0x110] sm:$0xff]
        %v1192 = vld [vmem:[%s1156 + $0x118] sm:$0xff]
        %v1193 = vld [vmem:[%s1156 + $0x120] sm:$0xff]
        %v1194 = vld [vmem:[%s1156 + $0x128] sm:$0xff]
        %v1195 = vld [vmem:[%s1156 + $0x130] sm:$0xff]
        %v1196 = vld [vmem:[%s1156 + $0x138] sm:$0xff]
        %v1197 = vld [vmem:[%s1156 + $0x140] sm:$0xff]
        %v1198 = vld [vmem:[%s1156 + $0x148] sm:$0xff]
        %v1199 = vld [vmem:[%s1156 + $0x150] sm:$0xff]
        %v1200 = vld [vmem:[%s1156 + $0x158] sm:$0xff]
        %v1201 = vld [vmem:[%s1156 + $0x160] sm:$0xff]
        %v1202 = vld [vmem:[%s1156 + $0x168] sm:$0xff]
        %v1203 = vld [vmem:[%s1156 + $0x170] sm:$0xff]
        %v1204 = vld [vmem:[%s1156 + $0x178] sm:$0xff]
        %v1205 = vld [vmem:[%s1156 + $0x180] sm:$0xff]
        %v1206 = vld [vmem:[%s1156 + $0x188] sm:$0xff]
        %v1207 = vld [vmem:[%s1156 + $0x190] sm:$0xff]
        %v1208 = vld [vmem:[%s1156 + $0x198] sm:$0xff]
        %v1209 = vld [vmem:[%s1156 + $0x1a0] sm:$0xff]
        %v1210 = vld [vmem:[%s1156 + $0x1a8] sm:$0xff]
        %v1211 = vld [vmem:[%s1156 + $0x1b0] sm:$0xff]
        %v1212 = vld [vmem:[%s1156 + $0x1b8] sm:$0xff]
        %v1213 = vld [vmem:[%s1156 + $0x1c0] sm:$0xff]
        %v1214 = vld [vmem:[%s1156 + $0x1c8] sm:$0xff]
        %v1215 = vld [vmem:[%s1156 + $0x1d0] sm:$0xff]
        %v1216 = vld [vmem:[%s1156 + $0x1d8] sm:$0xff]
        %v1217 = vld [vmem:[%s1156 + $0x1e0] sm:$0xff]
        %v1218 = vld [vmem:[%s1156 + $0x1e8] sm:$0xff]
        %v1219 = vld [vmem:[%s1156 + $0x1f0] sm:$0xff]
        %v1220 = vld [vmem:[%s1156 + $0x1f8] sm:$0xff]
        %v1221 = vld [vmem:[%s1156 + $0x200] sm:$0xff]
        %v1222 = vld [vmem:[%s1156 + $0x208] sm:$0xff]
        %v1223 = vld [vmem:[%s1156 + $0x210] sm:$0xff]
        %v1224 = vld [vmem:[%s1156 + $0x218] sm:$0xff]
        %v1225 = vld [vmem:[%s1156 + $0x220] sm:$0xff]
        %v1226 = vld [vmem:[%s1156 + $0x228] sm:$0xff]
        %v1227 = vld [vmem:[%s1156 + $0x230] sm:$0xff]
        %v1228 = vld [vmem:[%s1156 + $0x238] sm:$0xff]
        %v1229 = vld [vmem:[%s1156 + $0x240] sm:$0xff]
        %v1230 = vld [vmem:[%s1156 + $0x248] sm:$0xff]
        %v1231 = vld [vmem:[%s1156 + $0x250] sm:$0xff]
        %v1232 = vld [vmem:[%s1156 + $0x258] sm:$0xff]
        %v1233 = vld [vmem:[%s1156 + $0x260] sm:$0xff]
        %v1234 = vld [vmem:[%s1156 + $0x268] sm:$0xff]
        %v1235 = vld [vmem:[%s1156 + $0x270] sm:$0xff]
        %v1236 = vld [vmem:[%s1156 + $0x278] sm:$0xff]
        %v1237 = vld [vmem:[%s1156 + $0x280] sm:$0xff]
        %v1238 = vld [vmem:[%s1156 + $0x288] sm:$0xff]
        %v1239 = vld [vmem:[%s1156 + $0x290] sm:$0xff]
        %v1240 = vld [vmem:[%s1156 + $0x298] sm:$0xff]
        %v1241 = vld [vmem:[%s1156 + $0x2a0] sm:$0xff]
        %v1242 = vld [vmem:[%s1156 + $0x2a8] sm:$0xff]
        %v1243 = vld [vmem:[%s1156 + $0x2b0] sm:$0xff]
        %v1244 = vld [vmem:[%s1156 + $0x2b8] sm:$0xff]
        %v1245 = vld [vmem:[%s1156 + $0x2c0] sm:$0xff]
        %v1246 = vld [vmem:[%s1156 + $0x2c8] sm:$0xff]
        %v1247 = vld [vmem:[%s1156 + $0x2d0] sm:$0xff]
        %v1248 = vld [vmem:[%s1156 + $0x2d8] sm:$0xff]
        %v1249 = vld [vmem:[%s1156 + $0x2e0] sm:$0xff]
        %v1250 = vld [vmem:[%s1156 + $0x2e8] sm:$0xff]
        %v1251 = vld [vmem:[%s1156 + $0x2f0] sm:$0xff]
        %v1252 = vld [vmem:[%s1156 + $0x2f8] sm:$0xff]
        %v1253 = vld [vmem:[%s1156 + $0x300] sm:$0xff]
        %v1254 = vld [vmem:[%s1156 + $0x308] sm:$0xff]
        %v1255 = vld [vmem:[%s1156 + $0x310] sm:$0xff]
        %v1256 = vld [vmem:[%s1156 + $0x318] sm:$0xff]
        %v1257 = vld [vmem:[%s1156 + $0x320] sm:$0xff]
        %v1258 = vld [vmem:[%s1156 + $0x328] sm:$0xff]
        %v1259 = vld [vmem:[%s1156 + $0x330] sm:$0xff]
        %v1260 = vld [vmem:[%s1156 + $0x338] sm:$0xff]
        %v1261 = vld [vmem:[%s1156 + $0x340] sm:$0xff]
        %v1262 = vld [vmem:[%s1156 + $0x348] sm:$0xff]
        %v1263 = vld [vmem:[%s1156 + $0x350] sm:$0xff]
        %v1264 = vld [vmem:[%s1156 + $0x358] sm:$0xff]
        %v1265 = vld [vmem:[%s1156 + $0x360] sm:$0xff]
        %v1266 = vld [vmem:[%s1156 + $0x368] sm:$0xff]
        %v1267 = vld [vmem:[%s1156 + $0x370] sm:$0xff]
        %v1268 = vld [vmem:[%s1156 + $0x378] sm:$0xff]
        %v1269 = vld [vmem:[%s1156 + $0x380] sm:$0xff]
        %v1270 = vld [vmem:[%s1156 + $0x388] sm:$0xff]
        %v1271 = vld [vmem:[%s1156 + $0x390] sm:$0xff]
        %v1272 = vld [vmem:[%s1156 + $0x398] sm:$0xff]
        %v1273 = vld [vmem:[%s1156 + $0x3a0] sm:$0xff]
        %v1274 = vld [vmem:[%s1156 + $0x3a8] sm:$0xff]
        %v1275 = vld [vmem:[%s1156 + $0x3b0] sm:$0xff]
        %v1276 = vld [vmem:[%s1156 + $0x3b8] sm:$0xff]
        %v1277 = vld [vmem:[%s1156 + $0x3c0] sm:$0xff]
        %v1278 = vld [vmem:[%s1156 + $0x3c8] sm:$0xff]
        %v1279 = vld [vmem:[%s1156 + $0x3d0] sm:$0xff]
        %v1280 = vld [vmem:[%s1156 + $0x3d8] sm:$0xff]
        %v1281 = vld [vmem:[%s1156 + $0x3e0] sm:$0xff]
        %v1282 = vld [vmem:[%s1156 + $0x3e8] sm:$0xff]
        %v1283 = vld [vmem:[%s1156 + $0x3f0] sm:$0xff]
        %v1284 = vld [vmem:[%s1156 + $0x3f8] sm:$0xff]
        %v1285 = vld [vmem:[%s1156 + $0x400] sm:$0xff]
        %v1286 = vld [vmem:[%s1156 + $0x408] sm:$0xff]
        %v1287 = vld [vmem:[%s1156 + $0x410] sm:$0xff]
        %v1288 = vld [vmem:[%s1156 + $0x418] sm:$0xff]
        %v1289 = vld [vmem:[%s1156 + $0x420] sm:$0xff]
        %v1290 = vld [vmem:[%s1156 + $0x428] sm:$0xff]
        %v1291 = vld [vmem:[%s1156 + $0x430] sm:$0xff]
        %v1292 = vld [vmem:[%s1156 + $0x438] sm:$0xff]
        %v1293 = vld [vmem:[%s1156 + $0x440] sm:$0xff]
        %v1294 = vld [vmem:[%s1156 + $0x448] sm:$0xff]
        %v1295 = vld [vmem:[%s1156 + $0x450] sm:$0xff]
        %v1296 = vld [vmem:[%s1156 + $0x458] sm:$0xff]
        %v1297 = vld [vmem:[%s1156 + $0x460] sm:$0xff]
        %v1298 = vld [vmem:[%s1156 + $0x468] sm:$0xff]
        %v1299 = vld [vmem:[%s1156 + $0x470] sm:$0xff]
        %v1300 = vld [vmem:[%s1156 + $0x478] sm:$0xff]
        %v1301 = vld [vmem:[%s1156 + $0x480] sm:$0xff]
        %v1302 = vld [vmem:[%s1156 + $0x488] sm:$0xff]
        %v1303 = vld [vmem:[%s1156 + $0x490] sm:$0xff]
        %v1304 = vld [vmem:[%s1156 + $0x498] sm:$0xff]
        %v1305 = vld [vmem:[%s1156 + $0x4a0] sm:$0xff]
        %v1306 = vld [vmem:[%s1156 + $0x4a8] sm:$0xff]
        %v1307 = vld [vmem:[%s1156 + $0x4b0] sm:$0xff]
        %v1308 = vld [vmem:[%s1156 + $0x4b8] sm:$0xff]
        %v1309 = vld [vmem:[%s1156 + $0x4c0] sm:$0xff]
        %v1310 = vld [vmem:[%s1156 + $0x4c8] sm:$0xff]
        %v1311 = vld [vmem:[%s1156 + $0x4d0] sm:$0xff]
        %v1312 = vld [vmem:[%s1156 + $0x4d8] sm:$0xff]
        %v1313 = vld [vmem:[%s1156 + $0x4e0] sm:$0xff]
        %v1314 = vld [vmem:[%s1156 + $0x4e8] sm:$0xff]
        %v1315 = vld [vmem:[%s1156 + $0x4f0] sm:$0xff]
        %v1316 = vld [vmem:[%s1156 + $0x4f8] sm:$0xff]
        %v1317 = vld [vmem:[%s1156 + $0x500] sm:$0xff]
        %v1318 = vld [vmem:[%s1156 + $0x508] sm:$0xff]
        %v1319 = vld [vmem:[%s1156 + $0x510] sm:$0xff]
        %v1320 = vld [vmem:[%s1156 + $0x518] sm:$0xff]
        %v1321 = vld [vmem:[%s1156 + $0x520] sm:$0xff]
        %v1322 = vld [vmem:[%s1156 + $0x528] sm:$0xff]
        %v1323 = vld [vmem:[%s1156 + $0x530] sm:$0xff]
        %v1324 = vld [vmem:[%s1156 + $0x538] sm:$0xff]
        %v1325 = vld [vmem:[%s1156 + $0x540] sm:$0xff]
        %v1326 = vld [vmem:[%s1156 + $0x548] sm:$0xff]
        %v1327 = vld [vmem:[%s1156 + $0x550] sm:$0xff]
        %v1328 = vld [vmem:[%s1156 + $0x558] sm:$0xff]
        %v1329 = vld [vmem:[%s1156 + $0x560] sm:$0xff]
        %v1330 = vld [vmem:[%s1156 + $0x568] sm:$0xff]
        %v1331 = vld [vmem:[%s1156 + $0x570] sm:$0xff]
        %v1332 = vld [vmem:[%s1156 + $0x578] sm:$0xff]
        %v1333 = vld [vmem:[%s1156 + $0x580] sm:$0xff]
        %v1334 = vld [vmem:[%s1156 + $0x588] sm:$0xff]
        %v1335 = vld [vmem:[%s1156 + $0x590] sm:$0xff]
        %v1336 = vld [vmem:[%s1156 + $0x598] sm:$0xff]
        %v1337 = vld [vmem:[%s1156 + $0x5a0] sm:$0xff]
        %v1338 = vld [vmem:[%s1156 + $0x5a8] sm:$0xff]
        %v1339 = vld [vmem:[%s1156 + $0x5b0] sm:$0xff]
        %v1340 = vld [vmem:[%s1156 + $0x5b8] sm:$0xff]
        %v1341 = vld [vmem:[%s1156 + $0x5c0] sm:$0xff]
        %v1342 = vld [vmem:[%s1156 + $0x5c8] sm:$0xff]
        %v1343 = vld [vmem:[%s1156 + $0x5d0] sm:$0xff]
        %v1344 = vld [vmem:[%s1156 + $0x5d8] sm:$0xff]
        %v1345 = vld [vmem:[%s1156 + $0x5e0] sm:$0xff]
        %v1346 = vld [vmem:[%s1156 + $0x5e8] sm:$0xff]
        %v1347 = vld [vmem:[%s1156 + $0x5f0] sm:$0xff]
        %v1348 = vld [vmem:[%s1156 + $0x5f8] sm:$0xff]
        %v1349 = vld [vmem:[%s1156 + $0x600] sm:$0xff]
        %v1350 = vld [vmem:[%s1156 + $0x608] sm:$0xff]
        %v1351 = vld [vmem:[%s1156 + $0x610] sm:$0xff]
        %v1352 = vld [vmem:[%s1156 + $0x618] sm:$0xff]
        %v1353 = vld [vmem:[%s1156 + $0x620] sm:$0xff]
        %v1354 = vld [vmem:[%s1156 + $0x628] sm:$0xff]
        %v1355 = vld [vmem:[%s1156 + $0x630] sm:$0xff]
        %v1356 = vld [vmem:[%s1156 + $0x638] sm:$0xff]
        %v1357 = vld [vmem:[%s1156 + $0x640] sm:$0xff]
        %v1358 = vld [vmem:[%s1156 + $0x648] sm:$0xff]
        %v1359 = vld [vmem:[%s1156 + $0x650] sm:$0xff]
        %v1360 = vld [vmem:[%s1156 + $0x658] sm:$0xff]
        %v1361 = vld [vmem:[%s1156 + $0x660] sm:$0xff]
        %v1362 = vld [vmem:[%s1156 + $0x668] sm:$0xff]
        %v1363 = vld [vmem:[%s1156 + $0x670] sm:$0xff]
        %v1364 = vld [vmem:[%s1156 + $0x678] sm:$0xff]
        %v1365 = vld [vmem:[%s1156 + $0x680] sm:$0xff]
        %v1366 = vld [vmem:[%s1156 + $0x688] sm:$0xff]
        %v1367 = vld [vmem:[%s1156 + $0x690] sm:$0xff]
        %v1368 = vld [vmem:[%s1156 + $0x698] sm:$0xff]
        %v1369 = vld [vmem:[%s1156 + $0x6a0] sm:$0xff]
        %v1370 = vld [vmem:[%s1156 + $0x6a8] sm:$0xff]
        %v1371 = vld [vmem:[%s1156 + $0x6b0] sm:$0xff]
        %v1372 = vld [vmem:[%s1156 + $0x6b8] sm:$0xff]
        %v1373 = vld [vmem:[%s1156 + $0x6c0] sm:$0xff]
        %v1374 = vld [vmem:[%s1156 + $0x6c8] sm:$0xff]
        %v1375 = vld [vmem:[%s1156 + $0x6d0] sm:$0xff]
        %v1376 = vld [vmem:[%s1156 + $0x6d8] sm:$0xff]
        %v1377 = vld [vmem:[%s1156 + $0x6e0] sm:$0xff]
        %v1378 = vld [vmem:[%s1156 + $0x6e8] sm:$0xff]
        %v1379 = vld [vmem:[%s1156 + $0x6f0] sm:$0xff]
        %v1380 = vld [vmem:[%s1156 + $0x6f8] sm:$0xff]
        %v1381 = vld [vmem:[%s1156 + $0x700] sm:$0xff]
        %v1382 = vld [vmem:[%s1156 + $0x708] sm:$0xff]
        %v1383 = vld [vmem:[%s1156 + $0x710] sm:$0xff]
        %v1384 = vld [vmem:[%s1156 + $0x718] sm:$0xff]
        %v1385 = vld [vmem:[%s1156 + $0x720] sm:$0xff]
        %v1386 = vld [vmem:[%s1156 + $0x728] sm:$0xff]
        %v1387 = vld [vmem:[%s1156 + $0x730] sm:$0xff]
        %v1388 = vld [vmem:[%s1156 + $0x738] sm:$0xff]
        %v1389 = vld [vmem:[%s1156 + $0x740] sm:$0xff]
        %v1390 = vld [vmem:[%s1156 + $0x748] sm:$0xff]
        %v1391 = vld [vmem:[%s1156 + $0x750] sm:$0xff]
        %v1392 = vld [vmem:[%s1156 + $0x758] sm:$0xff]
        %v1393 = vld [vmem:[%s1156 + $0x760] sm:$0xff]
        %v1394 = vld [vmem:[%s1156 + $0x768] sm:$0xff]
        %v1395 = vld [vmem:[%s1156 + $0x770] sm:$0xff]
        %v1396 = vld [vmem:[%s1156 + $0x778] sm:$0xff]
        %v1397 = vld [vmem:[%s1156 + $0x780] sm:$0xff]
        %v1398 = vld [vmem:[%s1156 + $0x788] sm:$0xff]
        %v1399 = vld [vmem:[%s1156 + $0x790] sm:$0xff]
        %v1400 = vld [vmem:[%s1156 + $0x798] sm:$0xff]
        %v1401 = vld [vmem:[%s1156 + $0x7a0] sm:$0xff]
        %v1402 = vld [vmem:[%s1156 + $0x7a8] sm:$0xff]
        %v1403 = vld [vmem:[%s1156 + $0x7b0] sm:$0xff]
        %v1404 = vld [vmem:[%s1156 + $0x7b8] sm:$0xff]
        %v1405 = vld [vmem:[%s1156 + $0x7c0] sm:$0xff]
        %v1406 = vld [vmem:[%s1156 + $0x7c8] sm:$0xff]
        %v1407 = vld [vmem:[%s1156 + $0x7d0] sm:$0xff]
        %v1408 = vld [vmem:[%s1156 + $0x7d8] sm:$0xff]
        %v1409 = vld [vmem:[%s1156 + $0x7e0] sm:$0xff]
        %v1410 = vld [vmem:[%s1156 + $0x7e8] sm:$0xff]
        %v1411 = vld [vmem:[%s1156 + $0x7f0] sm:$0xff]
        %v1412 = vld [vmem:[%s1156 + $0x7f8] sm:$0xff]
        %v1413 = vld [vmem:[%s1156 + $0x800] sm:$0xff]
        %v1414 = vld [vmem:[%s1156 + $0x808] sm:$0xff]
        %v1415 = vld [vmem:[%s1156 + $0x810] sm:$0xff]
        %v1416 = vld [vmem:[%s1156 + $0x818] sm:$0xff]
        %v1417 = vld [vmem:[%s1156 + $0x820] sm:$0xff]
        %v1418 = vld [vmem:[%s1156 + $0x828] sm:$0xff]
        %v1419 = vld [vmem:[%s1156 + $0x830] sm:$0xff]
        %v1420 = vld [vmem:[%s1156 + $0x838] sm:$0xff]
        %v1421 = vld [vmem:[%s1156 + $0x840] sm:$0xff]
        %v1422 = vld [vmem:[%s1156 + $0x848] sm:$0xff]
        %v1423 = vld [vmem:[%s1156 + $0x850] sm:$0xff]
        %v1424 = vld [vmem:[%s1156 + $0x858] sm:$0xff]
        %v1425 = vld [vmem:[%s1156 + $0x860] sm:$0xff]
        %v1426 = vld [vmem:[%s1156 + $0x868] sm:$0xff]
        %v1427 = vld [vmem:[%s1156 + $0x870] sm:$0xff]
        %v1428 = vld [vmem:[%s1156 + $0x878] sm:$0xff]
        %v1429 = vld [vmem:[%s1156 + $0x880] sm:$0xff]
        %v1430 = vld [vmem:[%s1156 + $0x888] sm:$0xff]
        %v1431 = vld [vmem:[%s1156 + $0x890] sm:$0xff]
        %v1432 = vld [vmem:[%s1156 + $0x898] sm:$0xff]
        %v1433 = vld [vmem:[%s1156 + $0x8a0] sm:$0xff]
        %v1434 = vld [vmem:[%s1156 + $0x8a8] sm:$0xff]
        %v1435 = vld [vmem:[%s1156 + $0x8b0] sm:$0xff]
        %v1436 = vld [vmem:[%s1156 + $0x8b8] sm:$0xff]
        %v1437 = vld [vmem:[%s1156 + $0x8c0] sm:$0xff]
        %v1438 = vld [vmem:[%s1156 + $0x8c8] sm:$0xff]
        %v1439 = vld [vmem:[%s1156 + $0x8d0] sm:$0xff]
        %v1440 = vld [vmem:[%s1156 + $0x8d8] sm:$0xff]
        %v1441 = vld [vmem:[%s1156 + $0x8e0] sm:$0xff]
        %v1442 = vld [vmem:[%s1156 + $0x8e8] sm:$0xff]
        %v1443 = vld [vmem:[%s1156 + $0x8f0] sm:$0xff]
        %v1444 = vld [vmem:[%s1156 + $0x8f8] sm:$0xff]
        %v1445 = vld [vmem:[%s1156 + $0x900] sm:$0xff]
        %v1446 = vld [vmem:[%s1156 + $0x908] sm:$0xff]
        %v1447 = vld [vmem:[%s1156 + $0x910] sm:$0xff]
        %v1448 = vld [vmem:[%s1156 + $0x918] sm:$0xff]
        %v1449 = vld [vmem:[%s1156 + $0x920] sm:$0xff]
        %v1450 = vld [vmem:[%s1156 + $0x928] sm:$0xff]
        %v1451 = vld [vmem:[%s1156 + $0x930] sm:$0xff]
        %v1452 = vld [vmem:[%s1156 + $0x938] sm:$0xff]
        %v1453 = vld [vmem:[%s1156 + $0x940] sm:$0xff]
        %v1454 = vld [vmem:[%s1156 + $0x948] sm:$0xff]
        %v1455 = vld [vmem:[%s1156 + $0x950] sm:$0xff]
        %v1456 = vld [vmem:[%s1156 + $0x958] sm:$0xff]
        %v1457 = vld [vmem:[%s1156 + $0x960] sm:$0xff]
        %v1458 = vld [vmem:[%s1156 + $0x968] sm:$0xff]
        %v1459 = vld [vmem:[%s1156 + $0x970] sm:$0xff]
        %v1460 = vld [vmem:[%s1156 + $0x978] sm:$0xff]
        %v1461 = vld [vmem:[%s1156 + $0x980] sm:$0xff]
        %v1462 = vld [vmem:[%s1156 + $0x988] sm:$0xff]
        %v1463 = vld [vmem:[%s1156 + $0x990] sm:$0xff]
        %v1464 = vld [vmem:[%s1156 + $0x998] sm:$0xff]
        %v1465 = vld [vmem:[%s1156 + $0x9a0] sm:$0xff]
        %v1466 = vld [vmem:[%s1156 + $0x9a8] sm:$0xff]
        %v1467 = vld [vmem:[%s1156 + $0x9b0] sm:$0xff]
        %v1468 = vld [vmem:[%s1156 + $0x9b8] sm:$0xff]
        %v1469 = vld [vmem:[%s1156 + $0x9c0] sm:$0xff]
        %v1470 = vld [vmem:[%s1156 + $0x9c8] sm:$0xff]
        %v1471 = vld [vmem:[%s1156 + $0x9d0] sm:$0xff]
        %v1472 = vld [vmem:[%s1156 + $0x9d8] sm:$0xff]
        %v1473 = vld [vmem:[%s1156 + $0x9e0] sm:$0xff]
        %v1474 = vld [vmem:[%s1156 + $0x9e8] sm:$0xff]
        %v1475 = vld [vmem:[%s1156 + $0x9f0] sm:$0xff]
        %v1476 = vld [vmem:[%s1156 + $0x9f8] sm:$0xff]
        %v1477 = vld [vmem:[%s1156 + $0xa00] sm:$0xff]
        %v1478 = vld [vmem:[%s1156 + $0xa08] sm:$0xff]
        %v1479 = vld [vmem:[%s1156 + $0xa10] sm:$0xff]
        %v1480 = vld [vmem:[%s1156 + $0xa18] sm:$0xff]
        %v1481 = vld [vmem:[%s1156 + $0xa20] sm:$0xff]
        %v1482 = vld [vmem:[%s1156 + $0xa28] sm:$0xff]
        %v1483 = vld [vmem:[%s1156 + $0xa30] sm:$0xff]
        %v1484 = vld [vmem:[%s1156 + $0xa38] sm:$0xff]
        %v1485 = vld [vmem:[%s1156 + $0xa40] sm:$0xff]
        %v1486 = vld [vmem:[%s1156 + $0xa48] sm:$0xff]
        %v1487 = vld [vmem:[%s1156 + $0xa50] sm:$0xff]
        %v1488 = vld [vmem:[%s1156 + $0xa58] sm:$0xff]
        %v1489 = vld [vmem:[%s1156 + $0xa60] sm:$0xff]
        %v1490 = vld [vmem:[%s1156 + $0xa68] sm:$0xff]
        %v1491 = vld [vmem:[%s1156 + $0xa70] sm:$0xff]
        %v1492 = vld [vmem:[%s1156 + $0xa78] sm:$0xff]
        %v1493 = vld [vmem:[%s1156 + $0xa80] sm:$0xff]
        %v1494 = vld [vmem:[%s1156 + $0xa88] sm:$0xff]
        %v1495 = vld [vmem:[%s1156 + $0xa90] sm:$0xff]
        %v1496 = vld [vmem:[%s1156 + $0xa98] sm:$0xff]
        %v1497 = vld [vmem:[%s1156 + $0xaa0] sm:$0xff]
        %v1498 = vld [vmem:[%s1156 + $0xaa8] sm:$0xff]
        %v1499 = vld [vmem:[%s1156 + $0xab0] sm:$0xff]
        %v1500 = vld [vmem:[%s1156 + $0xab8] sm:$0xff]
        %v1501 = vld [vmem:[%s1156 + $0xac0] sm:$0xff]
        %v1502 = vld [vmem:[%s1156 + $0xac8] sm:$0xff]
        %v1503 = vld [vmem:[%s1156 + $0xad0] sm:$0xff]
        %v1504 = vld [vmem:[%s1156 + $0xad8] sm:$0xff]
        %v1505 = vld [vmem:[%s1156 + $0xae0] sm:$0xff]
        %v1506 = vld [vmem:[%s1156 + $0xae8] sm:$0xff]
        %v1507 = vld [vmem:[%s1156 + $0xaf0] sm:$0xff]
        %v1508 = vld [vmem:[%s1156 + $0xaf8] sm:$0xff]
        %v1509 = vld [vmem:[%s1156 + $0xb00] sm:$0xff]
        %v1510 = vld [vmem:[%s1156 + $0xb08] sm:$0xff]
        %v1511 = vld [vmem:[%s1156 + $0xb10] sm:$0xff]
        %v1512 = vld [vmem:[%s1156 + $0xb18] sm:$0xff]
        %v1513 = vld [vmem:[%s1156 + $0xb20] sm:$0xff]
        %v1514 = vld [vmem:[%s1156 + $0xb28] sm:$0xff]
        %v1515 = vld [vmem:[%s1156 + $0xb30] sm:$0xff]
        %v1516 = vld [vmem:[%s1156 + $0xb38] sm:$0xff]
        %v1517 = vld [vmem:[%s1156 + $0xb40] sm:$0xff]
        %v1518 = vld [vmem:[%s1156 + $0xb48] sm:$0xff]
        %v1519 = vld [vmem:[%s1156 + $0xb50] sm:$0xff]
        %v1520 = vld [vmem:[%s1156 + $0xb58] sm:$0xff]
        %v1521 = vld [vmem:[%s1156 + $0xb60] sm:$0xff]
        %v1522 = vld [vmem:[%s1156 + $0xb68] sm:$0xff]
        %v1523 = vld [vmem:[%s1156 + $0xb70] sm:$0xff]
        %v1524 = vld [vmem:[%s1156 + $0xb78] sm:$0xff]
        %v1525 = vld [vmem:[%s1156 + $0xb80] sm:$0xff]
        %v1526 = vld [vmem:[%s1156 + $0xb88] sm:$0xff]
        %v1527 = vld [vmem:[%s1156 + $0xb90] sm:$0xff]
        %v1528 = vld [vmem:[%s1156 + $0xb98] sm:$0xff]
        %v1529 = vld [vmem:[%s1156 + $0xba0] sm:$0xff]
        %v1530 = vld [vmem:[%s1156 + $0xba8] sm:$0xff]
        %v1531 = vld [vmem:[%s1156 + $0xbb0] sm:$0xff]
        %v1532 = vld [vmem:[%s1156 + $0xbb8] sm:$0xff]
        %v1533 = vld [vmem:[%s1156 + $0xbc0] sm:$0xff]
        %v1534 = vld [vmem:[%s1156 + $0xbc8] sm:$0xff]
        %v1535 = vld [vmem:[%s1156 + $0xbd0] sm:$0xff]
        %v1536 = vld [vmem:[%s1156 + $0xbd8] sm:$0xff]
        %v1537 = vld [vmem:[%s1156 + $0xbe0] sm:$0xff]
        %v1538 = vld [vmem:[%s1156 + $0xbe8] sm:$0xff]
        %v1539 = vld [vmem:[%s1156 + $0xbf0] sm:$0xff]
        %v1540 = vld [vmem:[%s1156 + $0xbf8] sm:$0xff]
        %1541 = vmatprep.subr.mxu0 %v1398
        %1542 = vmatpush1.msra.mxu0 %v1397
        %1543 = vmatprep.subr.mxu0 %v1382
        %1544 = vmatpush1.msra.mxu0 %v1381
        %1545 = vmatprep.subr.mxu0 %v1366
        %1546 = vmatpush1.msra.mxu0 %v1365
        %1547 = vmatprep.subr.mxu0 %v1350
        %1548 = vmatpush1.msra.mxu0 %v1349
        %1549 = vmatprep.subr.mxu0 %v1334
        %1550 = vmatpush1.msra.mxu0 %v1333
        %1551 = vmatprep.subr.mxu0 %v1318
        %1552 = vmatpush1.msra.mxu0 %v1317
        %1553 = vmatprep.subr.mxu0 %v1302
        %1554 = vmatpush1.msra.mxu0 %v1301
        %1555 = vmatprep.subr.mxu0 %v1286
        %1556 = vmatpush1.msra.mxu0 %v1285
        %1557 = vmatprep.subr.mxu0 %v1270
        %1558 = vmatpush1.msra.mxu0 %v1269
        %1559 = vmatprep.subr.mxu0 %v1254
        %1560 = vmatpush1.msra.mxu0 %v1253
        %1561 = vmatprep.subr.mxu0 %v1238
        %1562 = vmatpush1.msra.mxu0 %v1237
        %1563 = vmatprep.subr.mxu0 %v1222
        %1564 = vmatpush1.msra.mxu0 %v1221
        %1565 = vmatprep.subr.mxu0 %v1206
        %1566 = vmatpush1.msra.mxu0 %v1205
        %1567 = vmatprep.subr.mxu0 %v1190
        %1568 = vmatpush1.msra.mxu0 %v1189
        %1569 = vmatprep.subr.mxu0 %v1174
        %1570 = vmatpush1.msra.mxu0 %v1173
        %1571 = vmatprep.subr.mxu0 %v1158
        %1572 = vmatpush1.msra.mxu0 %v1157
        %1573 = vmatprep.subr.mxu0 0.0
        %1574 = vmatpush2.msra.mxu0 0.0
        %1575 = vmatprep.subr.mxu0 0.0
        %1576 = vmatpush2.msra.mxu0 0.0
        %1577 = vmatprep.subr.mxu0 0.0
        %1578 = vmatpush2.msra.mxu0 0.0
        %1579 = vmatprep.subr.mxu0 0.0
        %1580 = vmatpush2.msra.mxu0 0.0
        %1581 = vmatprep.subr.mxu0 0.0
        %1582 = vmatpush2.msra.mxu0 0.0
        %1583 = vmatprep.subr.mxu0 0.0
        %1584 = vmatpush2.msra.mxu0 0.0
        %1585 = vmatprep.subr.mxu0 0.0
        %1586 = vmatpush2.msra.mxu0 0.0
        %1587 = vmatprep.subr.mxu0 0.0
        %1588 = vmatpush2.msra.mxu0 0.0
        %1589 = vmatprep.subr.mxu0 %v1526
        %1590 = vmatpush2.msra.mxu0 %v1525
        %1591 = vmatprep.subr.mxu0 %v1510
        %1592 = vmatpush2.msra.mxu0 %v1509
        %1593 = vmatprep.subr.mxu0 %v1494
        %1594 = vmatpush2.msra.mxu0 %v1493
        %1595 = vmatprep.subr.mxu0 %v1478
        %1596 = vmatpush2.msra.mxu0 %v1477
        %1597 = vmatprep.subr.mxu0 %v1462
        %1598 = vmatpush2.msra.mxu0 %v1461
        %1599 = vmatprep.subr.mxu0 %v1446
        %1600 = vmatpush2.msra.mxu0 %v1445
        %1601 = vmatprep.subr.mxu0 %v1430
        %1602 = vmatpush2.msra.mxu0 %v1429
        %1603 = vmatprep.subr.mxu0 %v1414
        %1604 = vmatpush2.msra.mxu0 %v1413
        %1605 = vmatprep.mubr.f32.mxu0 %v570
        %1606 = vmatmul.mubr.f32.gmra.mxu0 %v182
        %v1607 = vpop.f32.mrf.mxu0
        %v1608 = vadd.f32 0.0, %v1607
        %v1609 = vpop.f32.mrf.mxu0
        %v1610 = vadd.f32 0.0, %v1609
        %1611 = vdwg.mxu0
        %1612 = vmatprep.subr.mxu0 %v1400
        %1613 = vmatpush1.msra.mxu0 %v1399
        %1614 = vmatprep.subr.mxu0 %v1384
        %1615 = vmatpush1.msra.mxu0 %v1383
        %1616 = vmatprep.subr.mxu0 %v1368
        %1617 = vmatpush1.msra.mxu0 %v1367
        %1618 = vmatprep.subr.mxu0 %v1352
        %1619 = vmatpush1.msra.mxu0 %v1351
        %1620 = vmatprep.subr.mxu0 %v1336
        %1621 = vmatpush1.msra.mxu0 %v1335
        %1622 = vmatprep.subr.mxu0 %v1320
        %1623 = vmatpush1.msra.mxu0 %v1319
        %1624 = vmatprep.subr.mxu0 %v1304
        %1625 = vmatpush1.msra.mxu0 %v1303
        %1626 = vmatprep.subr.mxu0 %v1288
        %1627 = vmatpush1.msra.mxu0 %v1287
        %1628 = vmatprep.subr.mxu0 %v1272
        %1629 = vmatpush1.msra.mxu0 %v1271
        %1630 = vmatprep.subr.mxu0 %v1256
        %1631 = vmatpush1.msra.mxu0 %v1255
        %1632 = vmatprep.subr.mxu0 %v1240
        %1633 = vmatpush1.msra.mxu0 %v1239
        %1634 = vmatprep.subr.mxu0 %v1224
        %1635 = vmatpush1.msra.mxu0 %v1223
        %1636 = vmatprep.subr.mxu0 %v1208
        %1637 = vmatpush1.msra.mxu0 %v1207
        %1638 = vmatprep.subr.mxu0 %v1192
        %1639 = vmatpush1.msra.mxu0 %v1191
        %1640 = vmatprep.subr.mxu0 %v1176
        %1641 = vmatpush1.msra.mxu0 %v1175
        %1642 = vmatprep.subr.mxu0 %v1160
        %1643 = vmatpush1.msra.mxu0 %v1159
        %1644 = vmatprep.subr.mxu0 0.0
        %1645 = vmatpush2.msra.mxu0 0.0
        %1646 = vmatprep.subr.mxu0 0.0
        %1647 = vmatpush2.msra.mxu0 0.0
        %1648 = vmatprep.subr.mxu0 0.0
        %1649 = vmatpush2.msra.mxu0 0.0
        %1650 = vmatprep.subr.mxu0 0.0
        %1651 = vmatpush2.msra.mxu0 0.0
        %1652 = vmatprep.subr.mxu0 0.0
        %1653 = vmatpush2.msra.mxu0 0.0
        %1654 = vmatprep.subr.mxu0 0.0
        %1655 = vmatpush2.msra.mxu0 0.0
        %1656 = vmatprep.subr.mxu0 0.0
        %1657 = vmatpush2.msra.mxu0 0.0
        %1658 = vmatprep.subr.mxu0 0.0
        %1659 = vmatpush2.msra.mxu0 0.0
        %1660 = vmatprep.subr.mxu0 %v1528
        %1661 = vmatpush2.msra.mxu0 %v1527
        %1662 = vmatprep.subr.mxu0 %v1512
        %1663 = vmatpush2.msra.mxu0 %v1511
        %1664 = vmatprep.subr.mxu0 %v1496
        %1665 = vmatpush2.msra.mxu0 %v1495
        %1666 = vmatprep.subr.mxu0 %v1480
        %1667 = vmatpush2.msra.mxu0 %v1479
        %1668 = vmatprep.subr.mxu0 %v1464
        %1669 = vmatpush2.msra.mxu0 %v1463
        %1670 = vmatprep.subr.mxu0 %v1448
        %1671 = vmatpush2.msra.mxu0 %v1447
        %1672 = vmatprep.subr.mxu0 %v1432
        %1673 = vmatpush2.msra.mxu0 %v1431
        %1674 = vmatprep.subr.mxu0 %v1416
        %1675 = vmatpush2.msra.mxu0 %v1415
        %1676 = vmatprep.mubr.f32.mxu0 %v570
        %1677 = vmatmul.mubr.f32.gmra.mxu0 %v182
        %v1678 = vpop.f32.mrf.mxu0
        %v1679 = vadd.f32 0.0, %v1678
        %v1680 = vpop.f32.mrf.mxu0
        %v1681 = vadd.f32 0.0, %v1680
        %1682 = vdwg.mxu0
        %1683 = vmatprep.subr.mxu0 %v1402
        %1684 = vmatpush1.msra.mxu0 %v1401
        %1685 = vmatprep.subr.mxu0 %v1386
        %1686 = vmatpush1.msra.mxu0 %v1385
        %1687 = vmatprep.subr.mxu0 %v1370
        %1688 = vmatpush1.msra.mxu0 %v1369
        %1689 = vmatprep.subr.mxu0 %v1354
        %1690 = vmatpush1.msra.mxu0 %v1353
        %1691 = vmatprep.subr.mxu0 %v1338
        %1692 = vmatpush1.msra.mxu0 %v1337
        %1693 = vmatprep.subr.mxu0 %v1322
        %1694 = vmatpush1.msra.mxu0 %v1321
        %1695 = vmatprep.subr.mxu0 %v1306
        %1696 = vmatpush1.msra.mxu0 %v1305
        %1697 = vmatprep.subr.mxu0 %v1290
        %1698 = vmatpush1.msra.mxu0 %v1289
        %1699 = vmatprep.subr.mxu0 %v1274
        %1700 = vmatpush1.msra.mxu0 %v1273
        %1701 = vmatprep.subr.mxu0 %v1258
        %1702 = vmatpush1.msra.mxu0 %v1257
        %1703 = vmatprep.subr.mxu0 %v1242
        %1704 = vmatpush1.msra.mxu0 %v1241
        %1705 = vmatprep.subr.mxu0 %v1226
        %1706 = vmatpush1.msra.mxu0 %v1225
        %1707 = vmatprep.subr.mxu0 %v1210
        %1708 = vmatpush1.msra.mxu0 %v1209
        %1709 = vmatprep.subr.mxu0 %v1194
        %1710 = vmatpush1.msra.mxu0 %v1193
        %1711 = vmatprep.subr.mxu0 %v1178
        %1712 = vmatpush1.msra.mxu0 %v1177
        %1713 = vmatprep.subr.mxu0 %v1162
        %1714 = vmatpush1.msra.mxu0 %v1161
        %1715 = vmatprep.subr.mxu0 0.0
        %1716 = vmatpush2.msra.mxu0 0.0
        %1717 = vmatprep.subr.mxu0 0.0
        %1718 = vmatpush2.msra.mxu0 0.0
        %1719 = vmatprep.subr.mxu0 0.0
        %1720 = vmatpush2.msra.mxu0 0.0
        %1721 = vmatprep.subr.mxu0 0.0
        %1722 = vmatpush2.msra.mxu0 0.0
        %1723 = vmatprep.subr.mxu0 0.0
        %1724 = vmatpush2.msra.mxu0 0.0
        %1725 = vmatprep.subr.mxu0 0.0
        %1726 = vmatpush2.msra.mxu0 0.0
        %1727 = vmatprep.subr.mxu0 0.0
        %1728 = vmatpush2.msra.mxu0 0.0
        %1729 = vmatprep.subr.mxu0 0.0
        %1730 = vmatpush2.msra.mxu0 0.0
        %1731 = vmatprep.subr.mxu0 %v1530
        %1732 = vmatpush2.msra.mxu0 %v1529
        %1733 = vmatprep.subr.mxu0 %v1514
        %1734 = vmatpush2.msra.mxu0 %v1513
        %1735 = vmatprep.subr.mxu0 %v1498
        %1736 = vmatpush2.msra.mxu0 %v1497
        %1737 = vmatprep.subr.mxu0 %v1482
        %1738 = vmatpush2.msra.mxu0 %v1481
        %1739 = vmatprep.subr.mxu0 %v1466
        %1740 = vmatpush2.msra.mxu0 %v1465
        %1741 = vmatprep.subr.mxu0 %v1450
        %1742 = vmatpush2.msra.mxu0 %v1449
        %1743 = vmatprep.subr.mxu0 %v1434
        %1744 = vmatpush2.msra.mxu0 %v1433
        %1745 = vmatprep.subr.mxu0 %v1418
        %1746 = vmatpush2.msra.mxu0 %v1417
        %1747 = vmatprep.mubr.f32.mxu0 %v570
        %1748 = vmatmul.mubr.f32.gmra.mxu0 %v182
        %v1749 = vpop.f32.mrf.mxu0
        %v1750 = vadd.f32 0.0, %v1749
        %v1751 = vpop.f32.mrf.mxu0
        %v1752 = vadd.f32 0.0, %v1751
        %1753 = vdwg.mxu0
        %1754 = vmatprep.subr.mxu0 %v1404
        %1755 = vmatpush1.msra.mxu0 %v1403
        %1756 = vmatprep.subr.mxu0 %v1388
        %1757 = vmatpush1.msra.mxu0 %v1387
        %1758 = vmatprep.subr.mxu0 %v1372
        %1759 = vmatpush1.msra.mxu0 %v1371
        %1760 = vmatprep.subr.mxu0 %v1356
        %1761 = vmatpush1.msra.mxu0 %v1355
        %1762 = vmatprep.subr.mxu0 %v1340
        %1763 = vmatpush1.msra.mxu0 %v1339
        %1764 = vmatprep.subr.mxu0 %v1324
        %1765 = vmatpush1.msra.mxu0 %v1323
        %1766 = vmatprep.subr.mxu0 %v1308
        %1767 = vmatpush1.msra.mxu0 %v1307
        %1768 = vmatprep.subr.mxu0 %v1292
        %1769 = vmatpush1.msra.mxu0 %v1291
        %1770 = vmatprep.subr.mxu0 %v1276
        %1771 = vmatpush1.msra.mxu0 %v1275
        %1772 = vmatprep.subr.mxu0 %v1260
        %1773 = vmatpush1.msra.mxu0 %v1259
        %1774 = vmatprep.subr.mxu0 %v1244
        %1775 = vmatpush1.msra.mxu0 %v1243
        %1776 = vmatprep.subr.mxu0 %v1228
        %1777 = vmatpush1.msra.mxu0 %v1227
        %1778 = vmatprep.subr.mxu0 %v1212
        %1779 = vmatpush1.msra.mxu0 %v1211
        %1780 = vmatprep.subr.mxu0 %v1196
        %1781 = vmatpush1.msra.mxu0 %v1195
        %1782 = vmatprep.subr.mxu0 %v1180
        %1783 = vmatpush1.msra.mxu0 %v1179
        %1784 = vmatprep.subr.mxu0 %v1164
        %1785 = vmatpush1.msra.mxu0 %v1163
        %1786 = vmatprep.subr.mxu0 0.0
        %1787 = vmatpush2.msra.mxu0 0.0
        %1788 = vmatprep.subr.mxu0 0.0
        %1789 = vmatpush2.msra.mxu0 0.0
        %1790 = vmatprep.subr.mxu0 0.0
        %1791 = vmatpush2.msra.mxu0 0.0
        %1792 = vmatprep.subr.mxu0 0.0
        %1793 = vmatpush2.msra.mxu0 0.0
        %1794 = vmatprep.subr.mxu0 0.0
        %1795 = vmatpush2.msra.mxu0 0.0
        %1796 = vmatprep.subr.mxu0 0.0
        %1797 = vmatpush2.msra.mxu0 0.0
        %1798 = vmatprep.subr.mxu0 0.0
        %1799 = vmatpush2.msra.mxu0 0.0
        %1800 = vmatprep.subr.mxu0 0.0
        %1801 = vmatpush2.msra.mxu0 0.0
        %1802 = vmatprep.subr.mxu0 %v1532
        %1803 = vmatpush2.msra.mxu0 %v1531
        %1804 = vmatprep.subr.mxu0 %v1516
        %1805 = vmatpush2.msra.mxu0 %v1515
        %1806 = vmatprep.subr.mxu0 %v1500
        %1807 = vmatpush2.msra.mxu0 %v1499
        %1808 = vmatprep.subr.mxu0 %v1484
        %1809 = vmatpush2.msra.mxu0 %v1483
        %1810 = vmatprep.subr.mxu0 %v1468
        %1811 = vmatpush2.msra.mxu0 %v1467
        %1812 = vmatprep.subr.mxu0 %v1452
        %1813 = vmatpush2.msra.mxu0 %v1451
        %1814 = vmatprep.subr.mxu0 %v1436
        %1815 = vmatpush2.msra.mxu0 %v1435
        %1816 = vmatprep.subr.mxu0 %v1420
        %1817 = vmatpush2.msra.mxu0 %v1419
        %1818 = vmatprep.mubr.f32.mxu0 %v570
        %1819 = vmatmul.mubr.f32.gmra.mxu0 %v182
        %v1820 = vpop.f32.mrf.mxu0
        %v1821 = vadd.f32 0.0, %v1820
        %v1822 = vpop.f32.mrf.mxu0
        %v1823 = vadd.f32 0.0, %v1822
        %1824 = vdwg.mxu0
        %1825 = vmatprep.subr.mxu0 %v1406
        %1826 = vmatpush1.msra.mxu0 %v1405
        %1827 = vmatprep.subr.mxu0 %v1390
        %1828 = vmatpush1.msra.mxu0 %v1389
        %1829 = vmatprep.subr.mxu0 %v1374
        %1830 = vmatpush1.msra.mxu0 %v1373
        %1831 = vmatprep.subr.mxu0 %v1358
        %1832 = vmatpush1.msra.mxu0 %v1357
        %1833 = vmatprep.subr.mxu0 %v1342
        %1834 = vmatpush1.msra.mxu0 %v1341
        %1835 = vmatprep.subr.mxu0 %v1326
        %1836 = vmatpush1.msra.mxu0 %v1325
        %1837 = vmatprep.subr.mxu0 %v1310
        %1838 = vmatpush1.msra.mxu0 %v1309
        %1839 = vmatprep.subr.mxu0 %v1294
        %1840 = vmatpush1.msra.mxu0 %v1293
        %1841 = vmatprep.subr.mxu0 %v1278
        %1842 = vmatpush1.msra.mxu0 %v1277
        %1843 = vmatprep.subr.mxu0 %v1262
        %1844 = vmatpush1.msra.mxu0 %v1261
        %1845 = vmatprep.subr.mxu0 %v1246
        %1846 = vmatpush1.msra.mxu0 %v1245
        %1847 = vmatprep.subr.mxu0 %v1230
        %1848 = vmatpush1.msra.mxu0 %v1229
        %1849 = vmatprep.subr.mxu0 %v1214
        %1850 = vmatpush1.msra.mxu0 %v1213
        %1851 = vmatprep.subr.mxu0 %v1198
        %1852 = vmatpush1.msra.mxu0 %v1197
        %1853 = vmatprep.subr.mxu0 %v1182
        %1854 = vmatpush1.msra.mxu0 %v1181
        %1855 = vmatprep.subr.mxu0 %v1166
        %1856 = vmatpush1.msra.mxu0 %v1165
        %1857 = vmatprep.subr.mxu0 0.0
        %1858 = vmatpush2.msra.mxu0 0.0
        %1859 = vmatprep.subr.mxu0 0.0
        %1860 = vmatpush2.msra.mxu0 0.0
        %1861 = vmatprep.subr.mxu0 0.0
        %1862 = vmatpush2.msra.mxu0 0.0
        %1863 = vmatprep.subr.mxu0 0.0
        %1864 = vmatpush2.msra.mxu0 0.0
        %1865 = vmatprep.subr.mxu0 0.0
        %1866 = vmatpush2.msra.mxu0 0.0
        %1867 = vmatprep.subr.mxu0 0.0
        %1868 = vmatpush2.msra.mxu0 0.0
        %1869 = vmatprep.subr.mxu0 0.0
        %1870 = vmatpush2.msra.mxu0 0.0
        %1871 = vmatprep.subr.mxu0 0.0
        %1872 = vmatpush2.msra.mxu0 0.0
        %1873 = vmatprep.subr.mxu0 %v1534
        %1874 = vmatpush2.msra.mxu0 %v1533
        %1875 = vmatprep.subr.mxu0 %v1518
        %1876 = vmatpush2.msra.mxu0 %v1517
        %1877 = vmatprep.subr.mxu0 %v1502
        %1878 = vmatpush2.msra.mxu0 %v1501
        %1879 = vmatprep.subr.mxu0 %v1486
        %1880 = vmatpush2.msra.mxu0 %v1485
        %1881 = vmatprep.subr.mxu0 %v1470
        %1882 = vmatpush2.msra.mxu0 %v1469
        %1883 = vmatprep.subr.mxu0 %v1454
        %1884 = vmatpush2.msra.mxu0 %v1453
        %1885 = vmatprep.subr.mxu0 %v1438
        %1886 = vmatpush2.msra.mxu0 %v1437
        %1887 = vmatprep.subr.mxu0 %v1422
        %1888 = vmatpush2.msra.mxu0 %v1421
        %1889 = vmatprep.mubr.f32.mxu0 %v570
        %1890 = vmatmul.mubr.f32.gmra.mxu0 %v182
        %v1891 = vpop.f32.mrf.mxu0
        %v1892 = vadd.f32 0.0, %v1891
        %v1893 = vpop.f32.mrf.mxu0
        %v1894 = vadd.f32 0.0, %v1893
        %1895 = vdwg.mxu0
        %1896 = vmatprep.subr.mxu0 %v1408
        %1897 = vmatpush1.msra.mxu0 %v1407
        %1898 = vmatprep.subr.mxu0 %v1392
        %1899 = vmatpush1.msra.mxu0 %v1391
        %1900 = vmatprep.subr.mxu0 %v1376
        %1901 = vmatpush1.msra.mxu0 %v1375
        %1902 = vmatprep.subr.mxu0 %v1360
        %1903 = vmatpush1.msra.mxu0 %v1359
        %1904 = vmatprep.subr.mxu0 %v1344
        %1905 = vmatpush1.msra.mxu0 %v1343
        %1906 = vmatprep.subr.mxu0 %v1328
        %1907 = vmatpush1.msra.mxu0 %v1327
        %1908 = vmatprep.subr.mxu0 %v1312
        %1909 = vmatpush1.msra.mxu0 %v1311
        %1910 = vmatprep.subr.mxu0 %v1296
        %1911 = vmatpush1.msra.mxu0 %v1295
        %1912 = vmatprep.subr.mxu0 %v1280
        %1913 = vmatpush1.msra.mxu0 %v1279
        %1914 = vmatprep.subr.mxu0 %v1264
        %1915 = vmatpush1.msra.mxu0 %v1263
        %1916 = vmatprep.subr.mxu0 %v1248
        %1917 = vmatpush1.msra.mxu0 %v1247
        %1918 = vmatprep.subr.mxu0 %v1232
        %1919 = vmatpush1.msra.mxu0 %v1231
        %1920 = vmatprep.subr.mxu0 %v1216
        %1921 = vmatpush1.msra.mxu0 %v1215
        %1922 = vmatprep.subr.mxu0 %v1200
        %1923 = vmatpush1.msra.mxu0 %v1199
        %1924 = vmatprep.subr.mxu0 %v1184
        %1925 = vmatpush1.msra.mxu0 %v1183
        %1926 = vmatprep.subr.mxu0 %v1168
        %1927 = vmatpush1.msra.mxu0 %v1167
        %1928 = vmatprep.subr.mxu0 0.0
        %1929 = vmatpush2.msra.mxu0 0.0
        %1930 = vmatprep.subr.mxu0 0.0
        %1931 = vmatpush2.msra.mxu0 0.0
        %1932 = vmatprep.subr.mxu0 0.0
        %1933 = vmatpush2.msra.mxu0 0.0
        %1934 = vmatprep.subr.mxu0 0.0
        %1935 = vmatpush2.msra.mxu0 0.0
        %1936 = vmatprep.subr.mxu0 0.0
        %1937 = vmatpush2.msra.mxu0 0.0
        %1938 = vmatprep.subr.mxu0 0.0
        %1939 = vmatpush2.msra.mxu0 0.0
        %1940 = vmatprep.subr.mxu0 0.0
        %1941 = vmatpush2.msra.mxu0 0.0
        %1942 = vmatprep.subr.mxu0 0.0
        %1943 = vmatpush2.msra.mxu0 0.0
        %1944 = vmatprep.subr.mxu0 %v1536
        %1945 = vmatpush2.msra.mxu0 %v1535
        %1946 = vmatprep.subr.mxu0 %v1520
        %1947 = vmatpush2.msra.mxu0 %v1519
        %1948 = vmatprep.subr.mxu0 %v1504
        %1949 = vmatpush2.msra.mxu0 %v1503
        %1950 = vmatprep.subr.mxu0 %v1488
        %1951 = vmatpush2.msra.mxu0 %v1487
        %1952 = vmatprep.subr.mxu0 %v1472
        %1953 = vmatpush2.msra.mxu0 %v1471
        %1954 = vmatprep.subr.mxu0 %v1456
        %1955 = vmatpush2.msra.mxu0 %v1455
        %1956 = vmatprep.subr.mxu0 %v1440
        %1957 = vmatpush2.msra.mxu0 %v1439
        %1958 = vmatprep.subr.mxu0 %v1424
        %1959 = vmatpush2.msra.mxu0 %v1423
        %1960 = vmatprep.mubr.f32.mxu0 %v570
        %1961 = vmatmul.mubr.f32.gmra.mxu0 %v182
        %v1962 = vpop.f32.mrf.mxu0
        %v1963 = vadd.f32 0.0, %v1962
        %v1964 = vpop.f32.mrf.mxu0
        %v1965 = vadd.f32 0.0, %v1964
        %1966 = vdwg.mxu0
        %1967 = vmatprep.subr.mxu0 %v1410
        %1968 = vmatpush1.msra.mxu0 %v1409
        %1969 = vmatprep.subr.mxu0 %v1394
        %1970 = vmatpush1.msra.mxu0 %v1393
        %1971 = vmatprep.subr.mxu0 %v1378
        %1972 = vmatpush1.msra.mxu0 %v1377
        %1973 = vmatprep.subr.mxu0 %v1362
        %1974 = vmatpush1.msra.mxu0 %v1361
        %1975 = vmatprep.subr.mxu0 %v1346
        %1976 = vmatpush1.msra.mxu0 %v1345
        %1977 = vmatprep.subr.mxu0 %v1330
        %1978 = vmatpush1.msra.mxu0 %v1329
        %1979 = vmatprep.subr.mxu0 %v1314
        %1980 = vmatpush1.msra.mxu0 %v1313
        %1981 = vmatprep.subr.mxu0 %v1298
        %1982 = vmatpush1.msra.mxu0 %v1297
        %1983 = vmatprep.subr.mxu0 %v1282
        %1984 = vmatpush1.msra.mxu0 %v1281
        %1985 = vmatprep.subr.mxu0 %v1266
        %1986 = vmatpush1.msra.mxu0 %v1265
        %1987 = vmatprep.subr.mxu0 %v1250
        %1988 = vmatpush1.msra.mxu0 %v1249
        %1989 = vmatprep.subr.mxu0 %v1234
        %1990 = vmatpush1.msra.mxu0 %v1233
        %1991 = vmatprep.subr.mxu0 %v1218
        %1992 = vmatpush1.msra.mxu0 %v1217
        %1993 = vmatprep.subr.mxu0 %v1202
        %1994 = vmatpush1.msra.mxu0 %v1201
        %1995 = vmatprep.subr.mxu0 %v1186
        %1996 = vmatpush1.msra.mxu0 %v1185
        %1997 = vmatprep.subr.mxu0 %v1170
        %1998 = vmatpush1.msra.mxu0 %v1169
        %1999 = vmatprep.subr.mxu0 0.0
        %2000 = vmatpush2.msra.mxu0 0.0
        %2001 = vmatprep.subr.mxu0 0.0
        %2002 = vmatpush2.msra.mxu0 0.0
        %2003 = vmatprep.subr.mxu0 0.0
        %2004 = vmatpush2.msra.mxu0 0.0
        %2005 = vmatprep.subr.mxu0 0.0
        %2006 = vmatpush2.msra.mxu0 0.0
        %2007 = vmatprep.subr.mxu0 0.0
        %2008 = vmatpush2.msra.mxu0 0.0
        %2009 = vmatprep.subr.mxu0 0.0
        %2010 = vmatpush2.msra.mxu0 0.0
        %2011 = vmatprep.subr.mxu0 0.0
        %2012 = vmatpush2.msra.mxu0 0.0
        %2013 = vmatprep.subr.mxu0 0.0
        %2014 = vmatpush2.msra.mxu0 0.0
        %2015 = vmatprep.subr.mxu0 %v1538
        %2016 = vmatpush2.msra.mxu0 %v1537
        %2017 = vmatprep.subr.mxu0 %v1522
        %2018 = vmatpush2.msra.mxu0 %v1521
        %2019 = vmatprep.subr.mxu0 %v1506
        %2020 = vmatpush2.msra.mxu0 %v1505
        %2021 = vmatprep.subr.mxu0 %v1490
        %2022 = vmatpush2.msra.mxu0 %v1489
        %2023 = vmatprep.subr.mxu0 %v1474
        %2024 = vmatpush2.msra.mxu0 %v1473
        %2025 = vmatprep.subr.mxu0 %v1458
        %2026 = vmatpush2.msra.mxu0 %v1457
        %2027 = vmatprep.subr.mxu0 %v1442
        %2028 = vmatpush2.msra.mxu0 %v1441
        %2029 = vmatprep.subr.mxu0 %v1426
        %2030 = vmatpush2.msra.mxu0 %v1425
        %2031 = vmatprep.mubr.f32.mxu0 %v570
        %2032 = vmatmul.mubr.f32.gmra.mxu0 %v182
        %v2033 = vpop.f32.mrf.mxu0
        %v2034 = vadd.f32 0.0, %v2033
        %v2035 = vpop.f32.mrf.mxu0
        %v2036 = vadd.f32 0.0, %v2035
        %2037 = vdwg.mxu0
        %2038 = vmatprep.subr.mxu0 %v1412
        %2039 = vmatpush1.msra.mxu0 %v1411
        %2040 = vmatprep.subr.mxu0 %v1396
        %2041 = vmatpush1.msra.mxu0 %v1395
        %2042 = vmatprep.subr.mxu0 %v1380
        %2043 = vmatpush1.msra.mxu0 %v1379
        %2044 = vmatprep.subr.mxu0 %v1364
        %2045 = vmatpush1.msra.mxu0 %v1363
        %2046 = vmatprep.subr.mxu0 %v1348
        %2047 = vmatpush1.msra.mxu0 %v1347
        %2048 = vmatprep.subr.mxu0 %v1332
        %2049 = vmatpush1.msra.mxu0 %v1331
        %2050 = vmatprep.subr.mxu0 %v1316
        %2051 = vmatpush1.msra.mxu0 %v1315
        %2052 = vmatprep.subr.mxu0 %v1300
        %2053 = vmatpush1.msra.mxu0 %v1299
        %2054 = vmatprep.subr.mxu0 %v1284
        %2055 = vmatpush1.msra.mxu0 %v1283
        %2056 = vmatprep.subr.mxu0 %v1268
        %2057 = vmatpush1.msra.mxu0 %v1267
        %2058 = vmatprep.subr.mxu0 %v1252
        %2059 = vmatpush1.msra.mxu0 %v1251
        %2060 = vmatprep.subr.mxu0 %v1236
        %2061 = vmatpush1.msra.mxu0 %v1235
        %2062 = vmatprep.subr.mxu0 %v1220
        %2063 = vmatpush1.msra.mxu0 %v1219
        %2064 = vmatprep.subr.mxu0 %v1204
        %2065 = vmatpush1.msra.mxu0 %v1203
        %2066 = vmatprep.subr.mxu0 %v1188
        %2067 = vmatpush1.msra.mxu0 %v1187
        %2068 = vmatprep.subr.mxu0 %v1172
        %2069 = vmatpush1.msra.mxu0 %v1171
        %2070 = vmatprep.subr.mxu0 0.0
        %2071 = vmatpush2.msra.mxu0 0.0
        %2072 = vmatprep.subr.mxu0 0.0
        %2073 = vmatpush2.msra.mxu0 0.0
        %2074 = vmatprep.subr.mxu0 0.0
        %2075 = vmatpush2.msra.mxu0 0.0
        %2076 = vmatprep.subr.mxu0 0.0
        %2077 = vmatpush2.msra.mxu0 0.0
        %2078 = vmatprep.subr.mxu0 0.0
        %2079 = vmatpush2.msra.mxu0 0.0
        %2080 = vmatprep.subr.mxu0 0.0
        %2081 = vmatpush2.msra.mxu0 0.0
        %2082 = vmatprep.subr.mxu0 0.0
        %2083 = vmatpush2.msra.mxu0 0.0
        %2084 = vmatprep.subr.mxu0 0.0
        %2085 = vmatpush2.msra.mxu0 0.0
        %2086 = vmatprep.subr.mxu0 %v1540
        %2087 = vmatpush2.msra.mxu0 %v1539
        %2088 = vmatprep.subr.mxu0 %v1524
        %2089 = vmatpush2.msra.mxu0 %v1523
        %2090 = vmatprep.subr.mxu0 %v1508
        %2091 = vmatpush2.msra.mxu0 %v1507
        %2092 = vmatprep.subr.mxu0 %v1492
        %2093 = vmatpush2.msra.mxu0 %v1491
        %2094 = vmatprep.subr.mxu0 %v1476
        %2095 = vmatpush2.msra.mxu0 %v1475
        %2096 = vmatprep.subr.mxu0 %v1460
        %2097 = vmatpush2.msra.mxu0 %v1459
        %2098 = vmatprep.subr.mxu0 %v1444
        %2099 = vmatpush2.msra.mxu0 %v1443
        %2100 = vmatprep.subr.mxu0 %v1428
        %2101 = vmatpush2.msra.mxu0 %v1427
        %2102 = vmatprep.mubr.f32.mxu0 %v570
        %2103 = vmatmul.mubr.f32.gmra.mxu0 %v182
        %v2104 = vpop.f32.mrf.mxu0
        %v2105 = vadd.f32 0.0, %v2104
        %v2106 = vpop.f32.mrf.mxu0
        %v2107 = vadd.f32 0.0, %v2106
        %2108 = vdwg.mxu0
        %s2109 = scalar_lea.vmem %s180, 128
        %2110 = vst [vmem:[%s2109] sm:$0x3f] %v1608
        %2111 = vst [vmem:[%s2109 + $0x8] sm:$0x3f] %v1610
        %2112 = vst [vmem:[%s2109 + $0x10] sm:$0x3f] %v1679
        %2113 = vst [vmem:[%s2109 + $0x18] sm:$0x3f] %v1681
        %2114 = vst [vmem:[%s2109 + $0x20] sm:$0x3f] %v1750
        %2115 = vst [vmem:[%s2109 + $0x28] sm:$0x3f] %v1752
        %2116 = vst [vmem:[%s2109 + $0x30] sm:$0x3f] %v1821
        %2117 = vst [vmem:[%s2109 + $0x38] sm:$0x3f] %v1823
        %2118 = vst [vmem:[%s2109 + $0x40] sm:$0x3f] %v1892
        %2119 = vst [vmem:[%s2109 + $0x48] sm:$0x3f] %v1894
        %2120 = vst [vmem:[%s2109 + $0x50] sm:$0x3f] %v1963
        %2121 = vst [vmem:[%s2109 + $0x58] sm:$0x3f] %v1965
        %2122 = vst [vmem:[%s2109 + $0x60] sm:$0x3f] %v2034
        %2123 = vst [vmem:[%s2109 + $0x68] sm:$0x3f] %v2036
        %2124 = vst [vmem:[%s2109 + $0x70] sm:$0x3f] %v2105
        %2125 = vst [vmem:[%s2109 + $0x78] sm:$0x3f] %v2107
        %s2126 = smul.u32 2, %s17
        %p2127 = scmp.lt.s32.totalorder %s2126, 3
        %s2128 = scalar_select %p2127, %s2126, 3
        %s2129 = smul.addr %s2128, 16
        %s2130 = smul.addr %s2129, 8
        %s2131 = scalar_lea.vmem %s2, %s2130
        // Predicated region
        $region37: #{tpu_custom_call.1} parent=27 // pred_check
          %p2132 = pneg %p82
        $region38: #{tpu_custom_call.1} parent=27 // pred_check_branch
          %2134 = sbr.rel (%p2132) target = $region40
        $region39: #{tpu_custom_call.1} parent=27 // pred_region
          %s2135 = smul.u32 2, %s17
        $region40: #{tpu_custom_call.1} parent=27 // pred_fallthru
          _
      $region28: #{tpu_custom_call.1} parent=5 // pred_fallthru
        _
      %p2136 = scmp.le.s32.totalorder 2, %s12
      // Predicated region
      $region41: #{tpu_custom_call.1} parent=5 // pred_check
        %p2137 = pneg %p2136
      $region42: #{tpu_custom_call.1} parent=5 // pred_check_branch
        %2139 = sbr.rel (%p2137) target = $region44
      $region43: #{tpu_custom_call.1} parent=5 // pred_region
        %s2140 = ssub.s32 %s12, 2
        // Predicated region
        $region45: #{tpu_custom_call.1} parent=43 // pred_check
          %p2141 = pneg %p88
        $region46: #{tpu_custom_call.1} parent=43 // pred_check_branch
          %2143 = sbr.rel (%p2141) target = $region48
        $region47: #{tpu_custom_call.1} parent=43 // pred_region
          %s2144 = smul.u32 2, %s18
          %p2145 = scmp.lt.s32.totalorder %s2144, 3
          %s2146 = scalar_select %p2145, %s2144, 3
          %s2147 = smul.addr %s2146, 16
          %s2148 = smul.addr %s2147, 8
          %s2149 = scalar_lea.vmem %s2, %s2148
        $region48: #{tpu_custom_call.1} parent=43 // pred_fallthru
          _
      $region44: #{tpu_custom_call.1} parent=5 // pred_fallthru
        _
    $region6: #{tpu_custom_call.1} parent=1 // loop_footer
      %s16 = sadd.s32 1, %s12
    $region7: #{tpu_custom_call.1} parent=1 // loop_footer_branch
      %11 = sbr.rel target = $region3
    $region8: #{tpu_custom_call.1} parent=1 // loop_exit
      _
    %2150 = vsyncpa [#allocation3], 1
    %s2151 = scalar_lea.sflag [#allocation3], 1
    %2152 = vsyncpa %s2151, 1
    %2153 = vsyncpa [#allocation5], 1

</llo_original>
